<compile_context>
chip_gen: v7x
topology: tpu7x:2x2x1
jax: 0.10.0
libtpu: 0.0.40
codegen_flags: <defaults>
</compile_context>

<pallas_src>
import jax
import jax.numpy as jnp
from jax import lax
from jax.experimental import pallas as pl
from jax.experimental.pallas import tpu as pltpu

GRAPH_WEIGHT = 0.8   # People_GNN default graph_weight
BN_EPS = 1e-5
SLOT = 32            # lanes per meta-path slot in the packed output slab


# ----------------------------------------------------------------------------
# Fused kernel: in-kernel blend + fc for M meta-paths, MLP head, packed store.
#   x1_ref : (TILE_N, H)        trans_conv output rows
#   x2_ref : (M, TILE_N, H)     graph_conv output rows, per meta-path
#   out    : (TILE_N, M*SLOT)   lane-dense slab:
#            slot m lanes [0,O) = emb_m ; slot 0 lanes [O,O+2) = predictions
# ----------------------------------------------------------------------------
def h_gnn_fused_kernel(x1_ref, x2_ref,
                       wa_ref, wb_ref, bfc_ref,
                       w1a_ref, w1b_ref, b1_ref,
                       w2_ref, b2_ref, w3s_ref, b3s_ref,
                       out_ref):
    f32 = jnp.float32
    x1 = x1_ref[...]                                       # (TN, H)
    M = x2_ref.shape[0]
    x2 = [x2_ref[m] for m in range(M)]                     # (TN, H) each

    # People_GNN blend folded into the matmuls (weights pre-padded to SLOT).
    base = jnp.dot(x1, wa_ref[...], preferred_element_type=f32) + bfc_ref[...]
    wb = wb_ref[...]
    embs = [base + jnp.dot(x2[m], wb, preferred_element_type=f32)
            for m in range(M)]                             # (TN, SLOT) each

    # MLP head.  People_GNN.fc composed with fc1 -> no dependency on embs.
    # TODO(synk): HG_Attention_IB (metapath_attention) is not defined in the
    # reference source; the head consumes the meta-path-0 embedding.
    h = jnp.maximum(
        jnp.dot(x1, w1a_ref[...], preferred_element_type=f32)
        + jnp.dot(x2[0], w1b_ref[...], preferred_element_type=f32)
        + b1_ref[...], 0.0)
    # bn1 folded into (w2, b2); dropout = identity (inference)
    h = jnp.maximum(
        jnp.dot(h, w2_ref[...], preferred_element_type=f32) + b2_ref[...], 0.0)
    # bn2 folded into fc3; fc3 weight pre-placed at lanes [O, O+2) of a
    # SLOT-wide zero matrix, so the result drops straight into slot 0's pad.
    pred_slot = (jnp.dot(h, w3s_ref[...], preferred_element_type=f32)
                 + b3s_ref[...])                           # (TN, SLOT)

    # Single lane-dense, unmasked 128-wide store.
    out_ref[...] = jnp.concatenate([embs[0] + pred_slot] + embs[1:], axis=-1)


# ----------------------------------------------------------------------------
# Wrapper: algebraic folding (blend -> matmul, BN -> next Linear, fc∘fc1),
# row tiling with an even grid, lane-dense output unpacking.
# ----------------------------------------------------------------------------
def h_gnn_fused(x1, x2s, w_fc, b_fc, head_params, *, max_tile_n=512):
    N, H = x1.shape
    M = x2s.shape[0]                     # number of meta-paths (4)
    O = w_fc.shape[1]                    # 20
    (w1, b1, g1, be1, rm1, rv1,
     w2, b2, g2, be2, rm2, rv2,
     w3, b3) = head_params
    D2, D3 = w2.shape[1], w3.shape[1]    # 10, 2
    assert M * SLOT == 128 and O + D3 <= SLOT

    gw = GRAPH_WEIGHT
    pad_o = SLOT - O
    # blend folded into fc; output padded to SLOT lanes (pad columns are 0)
    wfc_a = jnp.pad((1.0 - gw) * w_fc, ((0, 0), (0, pad_o)))   # (H, SLOT)
    wfc_b = jnp.pad(gw * w_fc,          ((0, 0), (0, pad_o)))  # (H, SLOT)
    bfc_p = jnp.pad(b_fc,               ((0, 0), (0, pad_o)))  # (1, SLOT)

    # fold eval-mode BatchNorms into the following Linear
    scale1 = g1 * lax.rsqrt(rv1 + BN_EPS)
    shift1 = be1 - rm1 * scale1
    w2f = scale1.reshape(-1, 1) * w2                           # (O, D2)
    b2f = shift1 @ w2 + b2                                     # (1, D2)
    scale2 = g2 * lax.rsqrt(rv2 + BN_EPS)
    shift2 = be2 - rm2 * scale2
    w3f = scale2.reshape(-1, 1) * w3                           # (D2, D3)
    b3f = shift2 @ w3 + b3                                     # (1, D3)

    # pre-compose People_GNN.fc with fc1 (legal: no nonlinearity in between)
    wfc_w1 = w_fc @ w1
    w1a = (1.0 - gw) * wfc_w1                                  # (H, O)
    w1b = gw * wfc_w1                                          # (H, O)
    b1f = b_fc @ w1 + b1                                       # (1, O)

    # fc3 placed directly at lanes [O, O+D3) of a SLOT-wide zero weight
    w3s = jnp.zeros((D2, SLOT), w3f.dtype).at[:, O:O + D3].set(w3f)
    b3s = jnp.zeros((1, SLOT), b3f.dtype).at[:, O:O + D3].set(b3f)

    # Row tile: cover N in 2 blocks when possible (even grid -> balanced on
    # v7x's two TensorCores; harmless on v5e/v6e), capped at max_tile_n,
    # rounded to a multiple of 8 for the sublane constraint.
    tile_n = max(8, min(max_tile_n, (((N + 1) // 2) + 7) // 8 * 8))
    grid = (pl.cdiv(N, tile_n),)

    const = lambda shape: pl.BlockSpec(shape, lambda i: (0,) * len(shape))

    slab = pl.pallas_call(
        h_gnn_fused_kernel,
        out_shape=jax.ShapeDtypeStruct((N, M * SLOT), jnp.float32),
        grid=grid,
        in_specs=[
            pl.BlockSpec((tile_n, H), lambda i: (i, 0)),        # x1 rows
            pl.BlockSpec((M, tile_n, H), lambda i: (0, i, 0)),  # x2 rows (all paths)
            const((H, SLOT)), const((H, SLOT)), const((1, SLOT)),  # blended fc
            const((H, O)), const((H, O)), const((1, O)),           # fc∘fc1
            const((O, D2)), const((1, D2)),                        # fc2 (bn1 folded)
            const((D2, SLOT)), const((1, SLOT)),                   # fc3 (bn2 folded, slotted)
        ],
        out_specs=pl.BlockSpec((tile_n, M * SLOT), lambda i: (i, 0)),
        compiler_params=pltpu.CompilerParams(
            dimension_semantics=("parallel",)),
    )(x1, x2s, wfc_a, wfc_b, bfc_p, w1a, w1b, b1f, w2f, b2f, w3s, b3s)

    # cheap wrapper-side unpack of the lane-dense slab
    meta_embs = slab.reshape(N, M, SLOT)[:, :, :O].transpose(1, 0, 2)  # (M, N, O)
    preds = slab[:, O:O + D3]                                          # (N, D3)
    return meta_embs, preds


# ----------------------------------------------------------------------------
# Pure-JAX reference (literal, unfused/unfolded module math)
# ----------------------------------------------------------------------------
def h_gnn_ref(x1, x2s, w_fc, b_fc, head_params):
    (w1, b1, g1, be1, rm1, rv1,
     w2, b2, g2, be2, rm2, rv2,
     w3, b3) = head_params
    gw = GRAPH_WEIGHT
    meta = []
    for m in range(x2s.shape[0]):
        xm = gw * x2s[m] + (1.0 - gw) * x1
        meta.append(xm @ w_fc + b_fc)
    meta = jnp.stack(meta)                            # (4, N, 20)

    h = meta[0]                                       # metapath_attention substitute
    h = jnp.maximum(h @ w1 + b1, 0.0)
    h = g1 * (h - rm1) / jnp.sqrt(rv1 + BN_EPS) + be1
    h = jnp.maximum(h @ w2 + b2, 0.0)
    h = g2 * (h - rm2) / jnp.sqrt(rv2 + BN_EPS) + be2
    pred = h @ w3 + b3
    return meta, pred


# ----------------------------------------------------------------------------
# Driver
# ----------------------------------------------------------------------------
if __name__ == "__main__":
    key = jax.random.PRNGKey(0)
    ks = iter(jax.random.split(key, 32))

    # Small shapes consistent with the module (real node_size = 871, hidden = 64,
    # People_GNN out = 20, 4 meta-paths; use N = 256 nodes here).
    N, HIDDEN, EMB, MID, OUT, NPATH = 256, 64, 20, 10, 2, 4

    # TODO(synk): TransConv / GraphConv / dataloader are not defined in the
    # reference source; x1 (trans_conv) and the four per-edge-type x2
    # (graph_conv) are deterministic synthetic stand-ins.
    x1 = jax.random.normal(next(ks), (N, HIDDEN), jnp.float32)
    x2s = jax.random.normal(next(ks), (NPATH, N, HIDDEN), jnp.float32)

    # People_GNN.fc  (Linear 64 -> 20), stored as [in, out]
    w_fc = jax.random.normal(next(ks), (HIDDEN, EMB), jnp.float32) * 0.1
    b_fc = jax.random.normal(next(ks), (1, EMB), jnp.float32) * 0.1

    # H_gnn head parameters (fc1 20->20, bn1, fc2 20->10, bn2, fc3 10->2)
    w1 = jax.random.normal(next(ks), (EMB, EMB), jnp.float32) * 0.1
    b1 = jax.random.normal(next(ks), (1, EMB), jnp.float32) * 0.1
    g1 = 1.0 + 0.1 * jax.random.normal(next(ks), (1, EMB), jnp.float32)
    be1 = 0.1 * jax.random.normal(next(ks), (1, EMB), jnp.float32)
    rm1 = 0.1 * jax.random.normal(next(ks), (1, EMB), jnp.float32)
    rv1 = jnp.abs(1.0 + 0.1 * jax.random.normal(next(ks), (1, EMB), jnp.float32))

    w2 = jax.random.normal(next(ks), (EMB, MID), jnp.float32) * 0.1
    b2 = jax.random.normal(next(ks), (1, MID), jnp.float32) * 0.1
    g2 = 1.0 + 0.1 * jax.random.normal(next(ks), (1, MID), jnp.float32)
    be2 = 0.1 * jax.random.normal(next(ks), (1, MID), jnp.float32)
    rm2 = 0.1 * jax.random.normal(next(ks), (1, MID), jnp.float32)
    rv2 = jnp.abs(1.0 + 0.1 * jax.random.normal(next(ks), (1, MID), jnp.float32))

    w3 = jax.random.normal(next(ks), (MID, OUT), jnp.float32) * 0.1
    b3 = jax.random.normal(next(ks), (1, OUT), jnp.float32) * 0.1

    head_params = (w1, b1, g1, be1, rm1, rv1,
                   w2, b2, g2, be2, rm2, rv2,
                   w3, b3)

    # One fused, batched kernel call for all 4 meta-paths + the MLP head.
    meta_embs, predictions = h_gnn_fused(x1, x2s, w_fc, b_fc, head_params)
    meta_embs = jax.block_until_ready(meta_embs)
    predictions = jax.block_until_ready(predictions)

    # Sanity check against the literal pure-JAX reference.
    ref_embs, ref_preds = h_gnn_ref(x1, x2s, w_fc, b_fc, head_params)
    assert meta_embs.shape == (NPATH, N, EMB)
    assert predictions.shape == (N, OUT)
    assert jnp.allclose(meta_embs, ref_embs, atol=1e-4, rtol=1e-4)
    assert jnp.allclose(predictions, ref_preds, atol=1e-4, rtol=1e-4)

    print("KERNEL_OK")
</pallas_src>

<mosaic_0001>
module attributes {stable_mosaic.version = 11 : i64} {
  func.func @h_gnn_fused_kernel(%arg0: i32, %arg1: memref<128x64xf32, #tpu.memory_space<vmem>>, %arg2: memref<4x128x64xf32, #tpu.memory_space<vmem>>, %arg3: memref<64x32xf32, #tpu.memory_space<vmem>>, %arg4: memref<64x32xf32, #tpu.memory_space<vmem>>, %arg5: memref<1x32xf32, #tpu.memory_space<vmem>>, %arg6: memref<64x20xf32, #tpu.memory_space<vmem>>, %arg7: memref<64x20xf32, #tpu.memory_space<vmem>>, %arg8: memref<1x20xf32, #tpu.memory_space<vmem>>, %arg9: memref<20x10xf32, #tpu.memory_space<vmem>>, %arg10: memref<1x10xf32, #tpu.memory_space<vmem>>, %arg11: memref<10x32xf32, #tpu.memory_space<vmem>>, %arg12: memref<1x32xf32, #tpu.memory_space<vmem>>, %arg13: memref<128x128xf32, #tpu.memory_space<vmem>>) attributes {dimension_semantics = [#tpu.dimension_semantics<parallel>], iteration_bounds = array<i64: 2>, scalar_prefetch = 0 : i64, scratch_operands = 0 : i64, tpu.core_type = #tpu.core_type<tc>, window_params = [{transform_indices = @transform_0, window_bounds = array<i64: 128, 64>}, {transform_indices = @transform_1, window_bounds = array<i64: 4, 128, 64>}, {pipeline_mode = #tpu.pipeline_mode<synchronous>, transform_indices = @transform_2, window_bounds = array<i64: 64, 32>}, {pipeline_mode = #tpu.pipeline_mode<synchronous>, transform_indices = @transform_3, window_bounds = array<i64: 64, 32>}, {pipeline_mode = #tpu.pipeline_mode<synchronous>, transform_indices = @transform_4, window_bounds = array<i64: 1, 32>}, {pipeline_mode = #tpu.pipeline_mode<synchronous>, transform_indices = @transform_5, window_bounds = array<i64: 64, 20>}, {pipeline_mode = #tpu.pipeline_mode<synchronous>, transform_indices = @transform_6, window_bounds = array<i64: 64, 20>}, {pipeline_mode = #tpu.pipeline_mode<synchronous>, transform_indices = @transform_7, window_bounds = array<i64: 1, 20>}, {pipeline_mode = #tpu.pipeline_mode<synchronous>, transform_indices = @transform_8, window_bounds = array<i64: 20, 10>}, {pipeline_mode = #tpu.pipeline_mode<synchronous>, transform_indices = @transform_9, window_bounds = array<i64: 1, 10>}, {pipeline_mode = #tpu.pipeline_mode<synchronous>, transform_indices = @transform_10, window_bounds = array<i64: 10, 32>}, {pipeline_mode = #tpu.pipeline_mode<synchronous>, transform_indices = @transform_11, window_bounds = array<i64: 1, 32>}, {transform_indices = @transform_12, window_bounds = array<i64: 128, 128>}]} {
    %c0 = arith.constant 0 : index
    %c0_0 = arith.constant 0 : index
    %0 = vector.load %arg1[%c0, %c0_0] : memref<128x64xf32, #tpu.memory_space<vmem>>, vector<128x64xf32>
    %c0_1 = arith.constant 0 : index
    %c0_2 = arith.constant 0 : index
    %c0_3 = arith.constant 0 : index
    %1 = vector.load %arg2[%c0_1, %c0_2, %c0_3] : memref<4x128x64xf32, #tpu.memory_space<vmem>>, vector<1x128x64xf32>
    %2 = vector.shape_cast %1 : vector<1x128x64xf32> to vector<128x64xf32>
    %c1 = arith.constant 1 : index
    %c0_4 = arith.constant 0 : index
    %c0_5 = arith.constant 0 : index
    %3 = vector.load %arg2[%c1, %c0_4, %c0_5] : memref<4x128x64xf32, #tpu.memory_space<vmem>>, vector<1x128x64xf32>
    %4 = vector.shape_cast %3 : vector<1x128x64xf32> to vector<128x64xf32>
    %c2 = arith.constant 2 : index
    %c0_6 = arith.constant 0 : index
    %c0_7 = arith.constant 0 : index
    %5 = vector.load %arg2[%c2, %c0_6, %c0_7] : memref<4x128x64xf32, #tpu.memory_space<vmem>>, vector<1x128x64xf32>
    %6 = vector.shape_cast %5 : vector<1x128x64xf32> to vector<128x64xf32>
    %c3 = arith.constant 3 : index
    %c0_8 = arith.constant 0 : index
    %c0_9 = arith.constant 0 : index
    %7 = vector.load %arg2[%c3, %c0_8, %c0_9] : memref<4x128x64xf32, #tpu.memory_space<vmem>>, vector<1x128x64xf32>
    %8 = vector.shape_cast %7 : vector<1x128x64xf32> to vector<128x64xf32>
    %c0_10 = arith.constant 0 : index
    %c0_11 = arith.constant 0 : index
    %9 = vector.load %arg3[%c0_10, %c0_11] : memref<64x32xf32, #tpu.memory_space<vmem>>, vector<64x32xf32>
    %cst = arith.constant dense<0.000000e+00> : vector<128x32xf32>
    %10 = tpu.matmul %0, %9, %cst {dimension_numbers = #tpu.dot_dimension_numbers<[1], [0], [0], [1], [0, 0, 1, 1], [], []>} : vector<128x64xf32>, vector<64x32xf32>, vector<128x32xf32> -> vector<128x32xf32>
    %c0_12 = arith.constant 0 : index
    %c0_13 = arith.constant 0 : index
    %11 = vector.load %arg5[%c0_12, %c0_13] : memref<1x32xf32, #tpu.memory_space<vmem>>, vector<1x32xf32>
    %12 = vector.broadcast %11 : vector<1x32xf32> to vector<128x32xf32>
    %13 = arith.addf %10, %12 : vector<128x32xf32>
    %c0_14 = arith.constant 0 : index
    %c0_15 = arith.constant 0 : index
    %14 = vector.load %arg4[%c0_14, %c0_15] : memref<64x32xf32, #tpu.memory_space<vmem>>, vector<64x32xf32>
    %cst_16 = arith.constant dense<0.000000e+00> : vector<128x32xf32>
    %15 = tpu.matmul %2, %14, %cst_16 {dimension_numbers = #tpu.dot_dimension_numbers<[1], [0], [0], [1], [0, 0, 1, 1], [], []>} : vector<128x64xf32>, vector<64x32xf32>, vector<128x32xf32> -> vector<128x32xf32>
    %16 = arith.addf %13, %15 : vector<128x32xf32>
    %cst_17 = arith.constant dense<0.000000e+00> : vector<128x32xf32>
    %17 = tpu.matmul %4, %14, %cst_17 {dimension_numbers = #tpu.dot_dimension_numbers<[1], [0], [0], [1], [0, 0, 1, 1], [], []>} : vector<128x64xf32>, vector<64x32xf32>, vector<128x32xf32> -> vector<128x32xf32>
    %18 = arith.addf %13, %17 : vector<128x32xf32>
    %cst_18 = arith.constant dense<0.000000e+00> : vector<128x32xf32>
    %19 = tpu.matmul %6, %14, %cst_18 {dimension_numbers = #tpu.dot_dimension_numbers<[1], [0], [0], [1], [0, 0, 1, 1], [], []>} : vector<128x64xf32>, vector<64x32xf32>, vector<128x32xf32> -> vector<128x32xf32>
    %20 = arith.addf %13, %19 : vector<128x32xf32>
    %cst_19 = arith.constant dense<0.000000e+00> : vector<128x32xf32>
    %21 = tpu.matmul %8, %14, %cst_19 {dimension_numbers = #tpu.dot_dimension_numbers<[1], [0], [0], [1], [0, 0, 1, 1], [], []>} : vector<128x64xf32>, vector<64x32xf32>, vector<128x32xf32> -> vector<128x32xf32>
    %22 = arith.addf %13, %21 : vector<128x32xf32>
    %c0_20 = arith.constant 0 : index
    %c0_21 = arith.constant 0 : index
    %23 = vector.load %arg6[%c0_20, %c0_21] : memref<64x20xf32, #tpu.memory_space<vmem>>, vector<64x20xf32>
    %cst_22 = arith.constant dense<0.000000e+00> : vector<128x20xf32>
    %24 = tpu.matmul %0, %23, %cst_22 {dimension_numbers = #tpu.dot_dimension_numbers<[1], [0], [0], [1], [0, 0, 1, 1], [], []>} : vector<128x64xf32>, vector<64x20xf32>, vector<128x20xf32> -> vector<128x20xf32>
    %c0_23 = arith.constant 0 : index
    %c0_24 = arith.constant 0 : index
    %25 = vector.load %arg7[%c0_23, %c0_24] : memref<64x20xf32, #tpu.memory_space<vmem>>, vector<64x20xf32>
    %cst_25 = arith.constant dense<0.000000e+00> : vector<128x20xf32>
    %26 = tpu.matmul %2, %25, %cst_25 {dimension_numbers = #tpu.dot_dimension_numbers<[1], [0], [0], [1], [0, 0, 1, 1], [], []>} : vector<128x64xf32>, vector<64x20xf32>, vector<128x20xf32> -> vector<128x20xf32>
    %27 = arith.addf %24, %26 : vector<128x20xf32>
    %c0_26 = arith.constant 0 : index
    %c0_27 = arith.constant 0 : index
    %28 = vector.load %arg8[%c0_26, %c0_27] : memref<1x20xf32, #tpu.memory_space<vmem>>, vector<1x20xf32>
    %29 = vector.broadcast %28 : vector<1x20xf32> to vector<128x20xf32>
    %30 = arith.addf %27, %29 : vector<128x20xf32>
    %cst_28 = arith.constant 0.000000e+00 : f32
    %31 = vector.broadcast %cst_28 : f32 to vector<128x20xf32>
    %32 = arith.maximumf %30, %31 : vector<128x20xf32>
    %c0_29 = arith.constant 0 : index
    %c0_30 = arith.constant 0 : index
    %33 = vector.load %arg9[%c0_29, %c0_30] : memref<20x10xf32, #tpu.memory_space<vmem>>, vector<20x10xf32>
    %cst_31 = arith.constant dense<0.000000e+00> : vector<128x10xf32>
    %34 = tpu.matmul %32, %33, %cst_31 {dimension_numbers = #tpu.dot_dimension_numbers<[1], [0], [0], [1], [0, 0, 1, 1], [], []>} : vector<128x20xf32>, vector<20x10xf32>, vector<128x10xf32> -> vector<128x10xf32>
    %c0_32 = arith.constant 0 : index
    %c0_33 = arith.constant 0 : index
    %35 = vector.load %arg10[%c0_32, %c0_33] : memref<1x10xf32, #tpu.memory_space<vmem>>, vector<1x10xf32>
    %36 = vector.broadcast %35 : vector<1x10xf32> to vector<128x10xf32>
    %37 = arith.addf %34, %36 : vector<128x10xf32>
    %cst_34 = arith.constant 0.000000e+00 : f32
    %38 = vector.broadcast %cst_34 : f32 to vector<128x10xf32>
    %39 = arith.maximumf %37, %38 : vector<128x10xf32>
    %c0_35 = arith.constant 0 : index
    %c0_36 = arith.constant 0 : index
    %40 = vector.load %arg11[%c0_35, %c0_36] : memref<10x32xf32, #tpu.memory_space<vmem>>, vector<10x32xf32>
    %cst_37 = arith.constant dense<0.000000e+00> : vector<128x32xf32>
    %41 = tpu.matmul %39, %40, %cst_37 {dimension_numbers = #tpu.dot_dimension_numbers<[1], [0], [0], [1], [0, 0, 1, 1], [], []>} : vector<128x10xf32>, vector<10x32xf32>, vector<128x32xf32> -> vector<128x32xf32>
    %c0_38 = arith.constant 0 : index
    %c0_39 = arith.constant 0 : index
    %42 = vector.load %arg12[%c0_38, %c0_39] : memref<1x32xf32, #tpu.memory_space<vmem>>, vector<1x32xf32>
    %43 = vector.broadcast %42 : vector<1x32xf32> to vector<128x32xf32>
    %44 = arith.addf %41, %43 : vector<128x32xf32>
    %45 = arith.addf %16, %44 : vector<128x32xf32>
    %46 = tpu.concatenate %45, %18, %20, %22 in 1 : vector<128x32xf32>, vector<128x32xf32>, vector<128x32xf32>, vector<128x32xf32> -> vector<128x128xf32>
    %c0_40 = arith.constant 0 : index
    %c0_41 = arith.constant 0 : index
    %47 = vector.load %arg13[%c0_40, %c0_41] : memref<128x128xf32, #tpu.memory_space<vmem>>, vector<128x128xf32>
    tpu.vector_store %arg13[%c0_40, %c0_41], %46 {strides = array<i32>} : memref<128x128xf32, #tpu.memory_space<vmem>>, vector<128x128xf32>,
    return
  }
  func.func @transform_0(%arg0: i32) -> (i32, i32) {
    %c0_i32 = arith.constant 0 : i32
    %c0_i32_0 = arith.constant 0 : i32
    return %arg0, %c0_i32 : i32, i32
  }
  func.func @transform_1(%arg0: i32) -> (i32, i32, i32) {
    %c0_i32 = arith.constant 0 : i32
    %c0_i32_0 = arith.constant 0 : i32
    %c0_i32_1 = arith.constant 0 : i32
    return %c0_i32, %arg0, %c0_i32_0 : i32, i32, i32
  }
  func.func @transform_2(%arg0: i32) -> (i32, i32) {
    %c0_i32 = arith.constant 0 : i32
    %c0_i32_0 = arith.constant 0 : i32
    %c0_i32_1 = arith.constant 0 : i32
    return %c0_i32, %c0_i32_0 : i32, i32
  }
  func.func @transform_3(%arg0: i32) -> (i32, i32) {
    %c0_i32 = arith.constant 0 : i32
    %c0_i32_0 = arith.constant 0 : i32
    %c0_i32_1 = arith.constant 0 : i32
    return %c0_i32, %c0_i32_0 : i32, i32
  }
  func.func @transform_4(%arg0: i32) -> (i32, i32) {
    %c0_i32 = arith.constant 0 : i32
    %c0_i32_0 = arith.constant 0 : i32
    %c0_i32_1 = arith.constant 0 : i32
    return %c0_i32, %c0_i32_0 : i32, i32
  }
  func.func @transform_5(%arg0: i32) -> (i32, i32) {
    %c0_i32 = arith.constant 0 : i32
    %c0_i32_0 = arith.constant 0 : i32
    %c0_i32_1 = arith.constant 0 : i32
    return %c0_i32, %c0_i32_0 : i32, i32
  }
  func.func @transform_6(%arg0: i32) -> (i32, i32) {
    %c0_i32 = arith.constant 0 : i32
    %c0_i32_0 = arith.constant 0 : i32
    %c0_i32_1 = arith.constant 0 : i32
    return %c0_i32, %c0_i32_0 : i32, i32
  }
  func.func @transform_7(%arg0: i32) -> (i32, i32) {
    %c0_i32 = arith.constant 0 : i32
    %c0_i32_0 = arith.constant 0 : i32
    %c0_i32_1 = arith.constant 0 : i32
    return %c0_i32, %c0_i32_0 : i32, i32
  }
  func.func @transform_8(%arg0: i32) -> (i32, i32) {
    %c0_i32 = arith.constant 0 : i32
    %c0_i32_0 = arith.constant 0 : i32
    %c0_i32_1 = arith.constant 0 : i32
    return %c0_i32, %c0_i32_0 : i32, i32
  }
  func.func @transform_9(%arg0: i32) -> (i32, i32) {
    %c0_i32 = arith.constant 0 : i32
    %c0_i32_0 = arith.constant 0 : i32
    %c0_i32_1 = arith.constant 0 : i32
    return %c0_i32, %c0_i32_0 : i32, i32
  }
  func.func @transform_10(%arg0: i32) -> (i32, i32) {
    %c0_i32 = arith.constant 0 : i32
    %c0_i32_0 = arith.constant 0 : i32
    %c0_i32_1 = arith.constant 0 : i32
    return %c0_i32, %c0_i32_0 : i32, i32
  }
  func.func @transform_11(%arg0: i32) -> (i32, i32) {
    %c0_i32 = arith.constant 0 : i32
    %c0_i32_0 = arith.constant 0 : i32
    %c0_i32_1 = arith.constant 0 : i32
    return %c0_i32, %c0_i32_0 : i32, i32
  }
  func.func @transform_12(%arg0: i32) -> (i32, i32) {
    %c0_i32 = arith.constant 0 : i32
    %c0_i32_0 = arith.constant 0 : i32
    return %arg0, %c0_i32 : i32, i32
  }
}

</mosaic_0001>

<llo_original>
// kernel: tpu_custom_call.1
$region0: #{tpu_custom_call.1}
  #allocation0 [shape = 'u32[]', space=smem, size = 0x4, offset = 0x4, fixed_abs, tag = 'smem constant byte address 0x4 - core index']
  #allocation1 [shape = 'u32[144,128]{1,0:T(1,128)}', space=vmem, size = 0x12000, scoped, tag = 'internal scratch']
  %s0 = inlined_call_operand.vmem [shape: f32[256,64], index: 0, kind: input, shape index: {}]
  %s1 = inlined_call_operand.vmem [shape: f32[4,256,64], index: 1, kind: input, shape index: {}]
  %s2 = inlined_call_operand.vmem [shape: f32[64,32], index: 2, kind: input, shape index: {}]
  %s3 = inlined_call_operand.vmem [shape: f32[64,32], index: 3, kind: input, shape index: {}]
  %s4 = inlined_call_operand.vmem [shape: f32[1,32], index: 4, kind: input, shape index: {}]
  %s5 = inlined_call_operand.vmem [shape: f32[64,20], index: 5, kind: input, shape index: {}]
  %s6 = inlined_call_operand.vmem [shape: f32[64,20], index: 6, kind: input, shape index: {}]
  %s7 = inlined_call_operand.vmem [shape: f32[1,20], index: 7, kind: input, shape index: {}]
  %s8 = inlined_call_operand.vmem [shape: f32[20,10], index: 8, kind: input, shape index: {}]
  %s9 = inlined_call_operand.vmem [shape: f32[1,10], index: 9, kind: input, shape index: {}]
  %s10 = inlined_call_operand.vmem [shape: f32[10,32], index: 10, kind: input, shape index: {}]
  %s11 = inlined_call_operand.vmem [shape: f32[1,32], index: 11, kind: input, shape index: {}]
  %s12 = inlined_call_operand.hbm [shape: f32[256,128], index: 12, kind: output, shape index: {}]
  %s13 = sld [smem:[#allocation0]]
  $region119: #{tpu_custom_call.1} parent=0
    _
  %s15 = ssub.s32 1, %s13
  %s16 = scalar_select 0, %s15, %s13
  $region1: #{tpu_custom_call.1} parent=0
    #allocation2 [shape = 'u8[524288]{0}', space=vmem, size = 0x80000, scoped, tag = 'input window, operand 1']
    #allocation3 [shape = 'u8[131072]{0}', space=vmem, size = 0x20000, scoped, tag = 'output window, operand 0']
    #allocation4 [shape = 's32[2]{0}', space=sflag, size = 0x8, scoped, tag = 'scoped memory for tpu_custom_call.1']
    %17 = vsyncpa [#allocation4], 0
    %s18 = scalar_lea.sflag [#allocation4], 1
    %19 = vsyncpa %s18, 0
    loop: start=0, step=1, limit=4
    $region2: #{tpu_custom_call.1} parent=1 // loop_pre_header
      _
    $region3: #{tpu_custom_call.1} parent=1 // loop_header
      %s21 = sphi 0, %s25
      %p22 = scmp.ge.s32.totalorder %s21, 4
      %s31 = sphi 0, %s33
      %s34 = sphi 0, %s31
      %s35 = sphi 0, %s34
      %s51 = sphi 0, %s35
      %s57 = sphi 0, %s59
      %s60 = sphi 0, %s57
      %s61 = sphi 0, %s60
      %s77 = sphi 0, %s61
      %s81 = sphi 0, %s81
      %s83 = sphi 0, %s81
      %s84 = sphi 0, %s83
      %s98 = sphi 0, %s84
      %s102 = sphi 0, %s102
      %s104 = sphi 0, %s102
      %s105 = sphi 0, %s104
      %s119 = sphi 0, %s105
      %s123 = sphi 0, %s123
      %s125 = sphi 0, %s123
      %s126 = sphi 0, %s125
      %s140 = sphi 0, %s126
      %s144 = sphi 0, %s144
      %s146 = sphi 0, %s144
      %s147 = sphi 0, %s146
      %s161 = sphi 0, %s147
      %s165 = sphi 0, %s165
      %s167 = sphi 0, %s165
      %s168 = sphi 0, %s167
      %s182 = sphi 0, %s168
      %s186 = sphi 0, %s186
      %s188 = sphi 0, %s186
      %s189 = sphi 0, %s188
      %s203 = sphi 0, %s189
      %s207 = sphi 0, %s207
      %s209 = sphi 0, %s207
      %s210 = sphi 0, %s209
      %s224 = sphi 0, %s210
      %s228 = sphi 0, %s228
      %s230 = sphi 0, %s228
      %s231 = sphi 0, %s230
      %s245 = sphi 0, %s231
      %s249 = sphi 0, %s249
      %s251 = sphi 0, %s249
      %s252 = sphi 0, %s251
      %s266 = sphi 0, %s252
      %s270 = sphi 0, %s270
      %s272 = sphi 0, %s270
      %s273 = sphi 0, %s272
      %s287 = sphi 0, %s273
      %s293 = sphi 0, %s295
      %s296 = sphi 0, %s293
      %s297 = sphi 0, %s296
      %s313 = sphi 0, %s297
    $region4: #{tpu_custom_call.1} parent=1 // loop_header_branch
      %24 = sbr.rel (%p22) target = $region8
    $region5: #{tpu_custom_call.1} parent=1 // loop_body
      %s26 = ssub.s32 %s21, 1
      %s27 = ssub.s32 %s21, 2
      %s28 = sadd.s32 %s21, 1
      %s29 = ssub.s32 %s21, %s28
      %p30 = scmp.eq.s32.totalorder %s29, 0
      %s32 = sadd.s32 %s31, 1
      %s33 = scalar_select %p30, %s31, %s32
      %p36 = pneg %p30
      %p37 = scmp.eq.s32.totalorder %s21, 1
      %p38 = por %p36, %p37
      %p39 = scmp.ne.s32.totalorder %s31, %s34
      %p40 = scmp.eq.s32.totalorder %s21, 0
      %p41 = por %p39, %p40
      %p42 = scmp.ne.s32.totalorder %s31, %s34
      %p43 = scmp.eq.s32.totalorder %s26, 1
      %p44 = por %p42, %p43
      %p45 = scmp.ne.s32.totalorder %s34, %s35
      %p46 = scmp.eq.s32.totalorder %s26, 0
      %p47 = por %p45, %p46
      %p48 = scmp.ne.s32.totalorder %s34, %s35
      %p49 = scmp.eq.s32.totalorder %s27, 1
      %p50 = por %p48, %p49
      %p52 = scmp.ne.s32.totalorder %s35, %s51
      %p53 = scmp.eq.s32.totalorder %s27, 0
      %p54 = por %p52, %p53
      %s55 = ssub.s32 %s21, %s28
      %p56 = scmp.eq.s32.totalorder %s55, 0
      %s58 = sadd.s32 %s57, 1
      %s59 = scalar_select %p56, %s57, %s58
      %p62 = pneg %p56
      %p63 = scmp.eq.s32.totalorder %s21, 1
      %p64 = por %p62, %p63
      %p65 = scmp.ne.s32.totalorder %s57, %s60
      %p66 = scmp.eq.s32.totalorder %s21, 0
      %p67 = por %p65, %p66
      %p68 = scmp.ne.s32.totalorder %s57, %s60
      %p69 = scmp.eq.s32.totalorder %s26, 1
      %p70 = por %p68, %p69
      %p71 = scmp.ne.s32.totalorder %s60, %s61
      %p72 = scmp.eq.s32.totalorder %s26, 0
      %p73 = por %p71, %p72
      %p74 = scmp.ne.s32.totalorder %s60, %s61
      %p75 = scmp.eq.s32.totalorder %s27, 1
      %p76 = por %p74, %p75
      %p78 = scmp.ne.s32.totalorder %s61, %s77
      %p79 = scmp.eq.s32.totalorder %s27, 0
      %p80 = por %p78, %p79
      %s82 = sadd.s32 %s81, 1
      %p85 = scmp.eq.s32.totalorder %s21, 1
      %p86 = scmp.ne.s32.totalorder %s81, %s83
      %p87 = scmp.eq.s32.totalorder %s21, 0
      %p88 = por %p86, %p87
      %p89 = scmp.ne.s32.totalorder %s81, %s83
      %p90 = scmp.eq.s32.totalorder %s26, 1
      %p91 = por %p89, %p90
      %p92 = scmp.ne.s32.totalorder %s83, %s84
      %p93 = scmp.eq.s32.totalorder %s26, 0
      %p94 = por %p92, %p93
      %p95 = scmp.ne.s32.totalorder %s83, %s84
      %p96 = scmp.eq.s32.totalorder %s27, 1
      %p97 = por %p95, %p96
      %p99 = scmp.ne.s32.totalorder %s84, %s98
      %p100 = scmp.eq.s32.totalorder %s27, 0
      %p101 = por %p99, %p100
      %s103 = sadd.s32 %s102, 1
      %p106 = scmp.eq.s32.totalorder %s21, 1
      %p107 = scmp.ne.s32.totalorder %s102, %s104
      %p108 = scmp.eq.s32.totalorder %s21, 0
      %p109 = por %p107, %p108
      %p110 = scmp.ne.s32.totalorder %s102, %s104
      %p111 = scmp.eq.s32.totalorder %s26, 1
      %p112 = por %p110, %p111
      %p113 = scmp.ne.s32.totalorder %s104, %s105
      %p114 = scmp.eq.s32.totalorder %s26, 0
      %p115 = por %p113, %p114
      %p116 = scmp.ne.s32.totalorder %s104, %s105
      %p117 = scmp.eq.s32.totalorder %s27, 1
      %p118 = por %p116, %p117
      %p120 = scmp.ne.s32.totalorder %s105, %s119
      %p121 = scmp.eq.s32.totalorder %s27, 0
      %p122 = por %p120, %p121
      %s124 = sadd.s32 %s123, 1
      %p127 = scmp.eq.s32.totalorder %s21, 1
      %p128 = scmp.ne.s32.totalorder %s123, %s125
      %p129 = scmp.eq.s32.totalorder %s21, 0
      %p130 = por %p128, %p129
      %p131 = scmp.ne.s32.totalorder %s123, %s125
      %p132 = scmp.eq.s32.totalorder %s26, 1
      %p133 = por %p131, %p132
      %p134 = scmp.ne.s32.totalorder %s125, %s126
      %p135 = scmp.eq.s32.totalorder %s26, 0
      %p136 = por %p134, %p135
      %p137 = scmp.ne.s32.totalorder %s125, %s126
      %p138 = scmp.eq.s32.totalorder %s27, 1
      %p139 = por %p137, %p138
      %p141 = scmp.ne.s32.totalorder %s126, %s140
      %p142 = scmp.eq.s32.totalorder %s27, 0
      %p143 = por %p141, %p142
      %s145 = sadd.s32 %s144, 1
      %p148 = scmp.eq.s32.totalorder %s21, 1
      %p149 = scmp.ne.s32.totalorder %s144, %s146
      %p150 = scmp.eq.s32.totalorder %s21, 0
      %p151 = por %p149, %p150
      %p152 = scmp.ne.s32.totalorder %s144, %s146
      %p153 = scmp.eq.s32.totalorder %s26, 1
      %p154 = por %p152, %p153
      %p155 = scmp.ne.s32.totalorder %s146, %s147
      %p156 = scmp.eq.s32.totalorder %s26, 0
      %p157 = por %p155, %p156
      %p158 = scmp.ne.s32.totalorder %s146, %s147
      %p159 = scmp.eq.s32.totalorder %s27, 1
      %p160 = por %p158, %p159
      %p162 = scmp.ne.s32.totalorder %s147, %s161
      %p163 = scmp.eq.s32.totalorder %s27, 0
      %p164 = por %p162, %p163
      %s166 = sadd.s32 %s165, 1
      %p169 = scmp.eq.s32.totalorder %s21, 1
      %p170 = scmp.ne.s32.totalorder %s165, %s167
      %p171 = scmp.eq.s32.totalorder %s21, 0
      %p172 = por %p170, %p171
      %p173 = scmp.ne.s32.totalorder %s165, %s167
      %p174 = scmp.eq.s32.totalorder %s26, 1
      %p175 = por %p173, %p174
      %p176 = scmp.ne.s32.totalorder %s167, %s168
      %p177 = scmp.eq.s32.totalorder %s26, 0
      %p178 = por %p176, %p177
      %p179 = scmp.ne.s32.totalorder %s167, %s168
      %p180 = scmp.eq.s32.totalorder %s27, 1
      %p181 = por %p179, %p180
      %p183 = scmp.ne.s32.totalorder %s168, %s182
      %p184 = scmp.eq.s32.totalorder %s27, 0
      %p185 = por %p183, %p184
      %s187 = sadd.s32 %s186, 1
      %p190 = scmp.eq.s32.totalorder %s21, 1
      %p191 = scmp.ne.s32.totalorder %s186, %s188
      %p192 = scmp.eq.s32.totalorder %s21, 0
      %p193 = por %p191, %p192
      %p194 = scmp.ne.s32.totalorder %s186, %s188
      %p195 = scmp.eq.s32.totalorder %s26, 1
      %p196 = por %p194, %p195
      %p197 = scmp.ne.s32.totalorder %s188, %s189
      %p198 = scmp.eq.s32.totalorder %s26, 0
      %p199 = por %p197, %p198
      %p200 = scmp.ne.s32.totalorder %s188, %s189
      %p201 = scmp.eq.s32.totalorder %s27, 1
      %p202 = por %p200, %p201
      %p204 = scmp.ne.s32.totalorder %s189, %s203
      %p205 = scmp.eq.s32.totalorder %s27, 0
      %p206 = por %p204, %p205
      %s208 = sadd.s32 %s207, 1
      %p211 = scmp.eq.s32.totalorder %s21, 1
      %p212 = scmp.ne.s32.totalorder %s207, %s209
      %p213 = scmp.eq.s32.totalorder %s21, 0
      %p214 = por %p212, %p213
      %p215 = scmp.ne.s32.totalorder %s207, %s209
      %p216 = scmp.eq.s32.totalorder %s26, 1
      %p217 = por %p215, %p216
      %p218 = scmp.ne.s32.totalorder %s209, %s210
      %p219 = scmp.eq.s32.totalorder %s26, 0
      %p220 = por %p218, %p219
      %p221 = scmp.ne.s32.totalorder %s209, %s210
      %p222 = scmp.eq.s32.totalorder %s27, 1
      %p223 = por %p221, %p222
      %p225 = scmp.ne.s32.totalorder %s210, %s224
      %p226 = scmp.eq.s32.totalorder %s27, 0
      %p227 = por %p225, %p226
      %s229 = sadd.s32 %s228, 1
      %p232 = scmp.eq.s32.totalorder %s21, 1
      %p233 = scmp.ne.s32.totalorder %s228, %s230
      %p234 = scmp.eq.s32.totalorder %s21, 0
      %p235 = por %p233, %p234
      %p236 = scmp.ne.s32.totalorder %s228, %s230
      %p237 = scmp.eq.s32.totalorder %s26, 1
      %p238 = por %p236, %p237
      %p239 = scmp.ne.s32.totalorder %s230, %s231
      %p240 = scmp.eq.s32.totalorder %s26, 0
      %p241 = por %p239, %p240
      %p242 = scmp.ne.s32.totalorder %s230, %s231
      %p243 = scmp.eq.s32.totalorder %s27, 1
      %p244 = por %p242, %p243
      %p246 = scmp.ne.s32.totalorder %s231, %s245
      %p247 = scmp.eq.s32.totalorder %s27, 0
      %p248 = por %p246, %p247
      %s250 = sadd.s32 %s249, 1
      %p253 = scmp.eq.s32.totalorder %s21, 1
      %p254 = scmp.ne.s32.totalorder %s249, %s251
      %p255 = scmp.eq.s32.totalorder %s21, 0
      %p256 = por %p254, %p255
      %p257 = scmp.ne.s32.totalorder %s249, %s251
      %p258 = scmp.eq.s32.totalorder %s26, 1
      %p259 = por %p257, %p258
      %p260 = scmp.ne.s32.totalorder %s251, %s252
      %p261 = scmp.eq.s32.totalorder %s26, 0
      %p262 = por %p260, %p261
      %p263 = scmp.ne.s32.totalorder %s251, %s252
      %p264 = scmp.eq.s32.totalorder %s27, 1
      %p265 = por %p263, %p264
      %p267 = scmp.ne.s32.totalorder %s252, %s266
      %p268 = scmp.eq.s32.totalorder %s27, 0
      %p269 = por %p267, %p268
      %s271 = sadd.s32 %s270, 1
      %p274 = scmp.eq.s32.totalorder %s21, 1
      %p275 = scmp.ne.s32.totalorder %s270, %s272
      %p276 = scmp.eq.s32.totalorder %s21, 0
      %p277 = por %p275, %p276
      %p278 = scmp.ne.s32.totalorder %s270, %s272
      %p279 = scmp.eq.s32.totalorder %s26, 1
      %p280 = por %p278, %p279
      %p281 = scmp.ne.s32.totalorder %s272, %s273
      %p282 = scmp.eq.s32.totalorder %s26, 0
      %p283 = por %p281, %p282
      %p284 = scmp.ne.s32.totalorder %s272, %s273
      %p285 = scmp.eq.s32.totalorder %s27, 1
      %p286 = por %p284, %p285
      %p288 = scmp.ne.s32.totalorder %s273, %s287
      %p289 = scmp.eq.s32.totalorder %s27, 0
      %p290 = por %p288, %p289
      %s291 = ssub.s32 %s21, %s28
      %p292 = scmp.eq.s32.totalorder %s291, 0
      %s294 = sadd.s32 %s293, 1
      %s295 = scalar_select %p292, %s293, %s294
      %p298 = pneg %p292
      %p299 = scmp.eq.s32.totalorder %s21, 1
      %p300 = por %p298, %p299
      %p301 = scmp.ne.s32.totalorder %s293, %s296
      %p302 = scmp.eq.s32.totalorder %s21, 0
      %p303 = por %p301, %p302
      %p304 = scmp.ne.s32.totalorder %s293, %s296
      %p305 = scmp.eq.s32.totalorder %s26, 1
      %p306 = por %p304, %p305
      %p307 = scmp.ne.s32.totalorder %s296, %s297
      %p308 = scmp.eq.s32.totalorder %s26, 0
      %p309 = por %p307, %p308
      %p310 = scmp.ne.s32.totalorder %s296, %s297
      %p311 = scmp.eq.s32.totalorder %s27, 1
      %p312 = por %p310, %p311
      %p314 = scmp.ne.s32.totalorder %s297, %s313
      %p315 = scmp.eq.s32.totalorder %s27, 0
      %p316 = por %p314, %p315
      %p317 = scmp.le.s32.totalorder 1, %s21
      %p318 = scmp.lt.s32.totalorder %s21, 3
      %p319 = pnand %p317, %p318
      %p320 = pneg %p319
      // Predicated region
      $region9: #{tpu_custom_call.1} parent=5 // pred_check
        _
      $region10: #{tpu_custom_call.1} parent=5 // pred_check_branch
        %322 = sbr.rel (%p319) target = $region12
      $region11: #{tpu_custom_call.1} parent=5 // pred_region
        %s323 = ssub.s32 %s21, 1
        // Predicated region
        $region13: #{tpu_custom_call.1} parent=11 // pred_check
          %p324 = pneg %p94
        $region14: #{tpu_custom_call.1} parent=11 // pred_check_branch
          %326 = sbr.rel (%p324) target = $region16
        $region15: #{tpu_custom_call.1} parent=11 // pred_region
          _
        $region16: #{tpu_custom_call.1} parent=11 // pred_fallthru
          _
        // Predicated region
        $region17: #{tpu_custom_call.1} parent=11 // pred_check
          %p327 = pneg %p115
        $region18: #{tpu_custom_call.1} parent=11 // pred_check_branch
          %329 = sbr.rel (%p327) target = $region20
        $region19: #{tpu_custom_call.1} parent=11 // pred_region
          _
        $region20: #{tpu_custom_call.1} parent=11 // pred_fallthru
          _
        // Predicated region
        $region21: #{tpu_custom_call.1} parent=11 // pred_check
          %p330 = pneg %p136
        $region22: #{tpu_custom_call.1} parent=11 // pred_check_branch
          %332 = sbr.rel (%p330) target = $region24
        $region23: #{tpu_custom_call.1} parent=11 // pred_region
          _
        $region24: #{tpu_custom_call.1} parent=11 // pred_fallthru
          _
        // Predicated region
        $region25: #{tpu_custom_call.1} parent=11 // pred_check
          %p333 = pneg %p157
        $region26: #{tpu_custom_call.1} parent=11 // pred_check_branch
          %335 = sbr.rel (%p333) target = $region28
        $region27: #{tpu_custom_call.1} parent=11 // pred_region
          _
        $region28: #{tpu_custom_call.1} parent=11 // pred_fallthru
          _
        // Predicated region
        $region29: #{tpu_custom_call.1} parent=11 // pred_check
          %p336 = pneg %p178
        $region30: #{tpu_custom_call.1} parent=11 // pred_check_branch
          %338 = sbr.rel (%p336) target = $region32
        $region31: #{tpu_custom_call.1} parent=11 // pred_region
          _
        $region32: #{tpu_custom_call.1} parent=11 // pred_fallthru
          _
        // Predicated region
        $region33: #{tpu_custom_call.1} parent=11 // pred_check
          %p339 = pneg %p199
        $region34: #{tpu_custom_call.1} parent=11 // pred_check_branch
          %341 = sbr.rel (%p339) target = $region36
        $region35: #{tpu_custom_call.1} parent=11 // pred_region
          _
        $region36: #{tpu_custom_call.1} parent=11 // pred_fallthru
          _
        // Predicated region
        $region37: #{tpu_custom_call.1} parent=11 // pred_check
          %p342 = pneg %p220
        $region38: #{tpu_custom_call.1} parent=11 // pred_check_branch
          %344 = sbr.rel (%p342) target = $region40
        $region39: #{tpu_custom_call.1} parent=11 // pred_region
          _
        $region40: #{tpu_custom_call.1} parent=11 // pred_fallthru
          _
        // Predicated region
        $region41: #{tpu_custom_call.1} parent=11 // pred_check
          %p345 = pneg %p241
        $region42: #{tpu_custom_call.1} parent=11 // pred_check_branch
          %347 = sbr.rel (%p345) target = $region44
        $region43: #{tpu_custom_call.1} parent=11 // pred_region
          _
        $region44: #{tpu_custom_call.1} parent=11 // pred_fallthru
          _
        // Predicated region
        $region45: #{tpu_custom_call.1} parent=11 // pred_check
          %p348 = pneg %p262
        $region46: #{tpu_custom_call.1} parent=11 // pred_check_branch
          %350 = sbr.rel (%p348) target = $region48
        $region47: #{tpu_custom_call.1} parent=11 // pred_region
          _
        $region48: #{tpu_custom_call.1} parent=11 // pred_fallthru
          _
        // Predicated region
        $region49: #{tpu_custom_call.1} parent=11 // pred_check
          %p351 = pneg %p283
        $region50: #{tpu_custom_call.1} parent=11 // pred_check_branch
          %353 = sbr.rel (%p351) target = $region52
        $region51: #{tpu_custom_call.1} parent=11 // pred_region
          _
        $region52: #{tpu_custom_call.1} parent=11 // pred_fallthru
          _
      $region12: #{tpu_custom_call.1} parent=5 // pred_fallthru
        _
      %p354 = scmp.lt.s32.totalorder %s21, 2
      // Predicated region
      $region53: #{tpu_custom_call.1} parent=5 // pred_check
        %p355 = pneg %p354
      $region54: #{tpu_custom_call.1} parent=5 // pred_check_branch
        %357 = sbr.rel (%p355) target = $region56
      $region55: #{tpu_custom_call.1} parent=5 // pred_region
        // Predicated region
        $region57: #{tpu_custom_call.1} parent=55 // pred_check
          %p358 = pneg %p41
        $region58: #{tpu_custom_call.1} parent=55 // pred_check_branch
          %360 = sbr.rel (%p358) target = $region60
        $region59: #{tpu_custom_call.1} parent=55 // pred_region
          %s361 = smul.u32 16, %s21
          %p362 = scmp.lt.s32.totalorder %s361, 31
          %s363 = scalar_select %p362, %s361, 31
          %s364 = smul.addr %s363, 8
          %s365 = scalar_lea.vmem %s0, %s364
          %s366 = smul.u32 16, %s21
        $region60: #{tpu_custom_call.1} parent=55 // pred_fallthru
          _
        // Predicated region
        $region61: #{tpu_custom_call.1} parent=55 // pred_check
          %p367 = pneg %p67
        $region62: #{tpu_custom_call.1} parent=55 // pred_check_branch
          %369 = sbr.rel (%p367) target = $region64
        $region63: #{tpu_custom_call.1} parent=55 // pred_region
          %s370 = sand.u32 %s57, 1
          %s371 = sand.u32 %s57, 1
          %s372 = smul.addr %s371, 512
          %s373 = scalar_lea.vmem [#allocation2], %s372
          %s374 = smul.u32 16, %s21
          %s375 = smul.addr %s374, 8
          %s376 = scalar_lea.vmem %s1, %s375
          // Predicated region
          $region65: #{tpu_custom_call.1} parent=63 // pred_check
            _
          $region66: #{tpu_custom_call.1} parent=63 // pred_check_branch
            %378 = sbr.rel (0) target = $region68
          $region67: #{tpu_custom_call.1} parent=63 // pred_region
            // Predicated region
            $region69: #{tpu_custom_call.1} parent=67 // pred_check
              _
            $region70: #{tpu_custom_call.1} parent=67 // pred_check_branch
              %380 = sbr.rel (0) target = $region72
            $region71: #{tpu_custom_call.1} parent=67 // pred_region
              // Predicated region
              $region84: #{tpu_custom_call.1} parent=71 // pred_check
                _
              $region85: #{tpu_custom_call.1} parent=71 // pred_check_branch
                %521 = sbr.rel (0) target = $region87
              $region86: #{tpu_custom_call.1} parent=71 // pred_region
                loop: start=0, step=1, limit=1
                $region88: #{tpu_custom_call.1} parent=86 // loop_pre_header
                  _
                $region89: #{tpu_custom_call.1} parent=86 // loop_header
                  %s523 = sphi 0, %s527
                  %p524 = scmp.ge.s32.totalorder %s523, 1
                  %s528 = sphi %s376, %s376
                  %s529 = sphi %s373, %s373
                $region90: #{tpu_custom_call.1} parent=86 // loop_header_branch
                  %526 = sbr.rel (%p524) target = $region94
                $region91: #{tpu_custom_call.1} parent=86 // loop_body
                  %v530 = vld [vmem:[%s528] sm:$0xff]
                  %531 = vst [vmem:[%s529] sm:$0xff] %v530
                  %v532 = vld [vmem:[%s528 + $0x8] sm:$0xff]
                  %533 = vst [vmem:[%s529 + $0x8] sm:$0xff] %v532
                  %v534 = vld [vmem:[%s528 + $0x10] sm:$0xff]
                  %535 = vst [vmem:[%s529 + $0x10] sm:$0xff] %v534
                  %v536 = vld [vmem:[%s528 + $0x18] sm:$0xff]
                  %537 = vst [vmem:[%s529 + $0x18] sm:$0xff] %v536
                  %v538 = vld [vmem:[%s528 + $0x20] sm:$0xff]
                  %539 = vst [vmem:[%s529 + $0x20] sm:$0xff] %v538
                  %v540 = vld [vmem:[%s528 + $0x28] sm:$0xff]
                  %541 = vst [vmem:[%s529 + $0x28] sm:$0xff] %v540
                  %v542 = vld [vmem:[%s528 + $0x30] sm:$0xff]
                  %543 = vst [vmem:[%s529 + $0x30] sm:$0xff] %v542
                  %v544 = vld [vmem:[%s528 + $0x38] sm:$0xff]
                  %545 = vst [vmem:[%s529 + $0x38] sm:$0xff] %v544
                  %v546 = vld [vmem:[%s528 + $0x40] sm:$0xff]
                  %547 = vst [vmem:[%s529 + $0x40] sm:$0xff] %v546
                  %v548 = vld [vmem:[%s528 + $0x48] sm:$0xff]
                  %549 = vst [vmem:[%s529 + $0x48] sm:$0xff] %v548
                  %v550 = vld [vmem:[%s528 + $0x50] sm:$0xff]
                  %551 = vst [vmem:[%s529 + $0x50] sm:$0xff] %v550
                  %v552 = vld [vmem:[%s528 + $0x58] sm:$0xff]
                  %553 = vst [vmem:[%s529 + $0x58] sm:$0xff] %v552
                  %v554 = vld [vmem:[%s528 + $0x60] sm:$0xff]
                  %555 = vst [vmem:[%s529 + $0x60] sm:$0xff] %v554
                  %v556 = vld [vmem:[%s528 + $0x68] sm:$0xff]
                  %557 = vst [vmem:[%s529 + $0x68] sm:$0xff] %v556
                  %v558 = vld [vmem:[%s528 + $0x70] sm:$0xff]
                  %559 = vst [vmem:[%s529 + $0x70] sm:$0xff] %v558
                  %v560 = vld [vmem:[%s528 + $0x78] sm:$0xff]
                  %561 = vst [vmem:[%s529 + $0x78] sm:$0xff] %v560
                  %v562 = vld [vmem:[%s528 + $0x100] sm:$0xff]
                  %563 = vst [vmem:[%s529 + $0x80] sm:$0xff] %v562
                  %v564 = vld [vmem:[%s528 + $0x108] sm:$0xff]
                  %565 = vst [vmem:[%s529 + $0x88] sm:$0xff] %v564
                  %v566 = vld [vmem:[%s528 + $0x110] sm:$0xff]
                  %567 = vst [vmem:[%s529 + $0x90] sm:$0xff] %v566
                  %v568 = vld [vmem:[%s528 + $0x118] sm:$0xff]
                  %569 = vst [vmem:[%s529 + $0x98] sm:$0xff] %v568
                  %v570 = vld [vmem:[%s528 + $0x120] sm:$0xff]
                  %571 = vst [vmem:[%s529 + $0xa0] sm:$0xff] %v570
                  %v572 = vld [vmem:[%s528 + $0x128] sm:$0xff]
                  %573 = vst [vmem:[%s529 + $0xa8] sm:$0xff] %v572
                  %v574 = vld [vmem:[%s528 + $0x130] sm:$0xff]
                  %575 = vst [vmem:[%s529 + $0xb0] sm:$0xff] %v574
                  %v576 = vld [vmem:[%s528 + $0x138] sm:$0xff]
                  %577 = vst [vmem:[%s529 + $0xb8] sm:$0xff] %v576
                  %v578 = vld [vmem:[%s528 + $0x140] sm:$0xff]
                  %579 = vst [vmem:[%s529 + $0xc0] sm:$0xff] %v578
                  %v580 = vld [vmem:[%s528 + $0x148] sm:$0xff]
                  %581 = vst [vmem:[%s529 + $0xc8] sm:$0xff] %v580
                  %v582 = vld [vmem:[%s528 + $0x150] sm:$0xff]
                  %583 = vst [vmem:[%s529 + $0xd0] sm:$0xff] %v582
                  %v584 = vld [vmem:[%s528 + $0x158] sm:$0xff]
                  %585 = vst [vmem:[%s529 + $0xd8] sm:$0xff] %v584
                  %v586 = vld [vmem:[%s528 + $0x160] sm:$0xff]
                  %587 = vst [vmem:[%s529 + $0xe0] sm:$0xff] %v586
                  %v588 = vld [vmem:[%s528 + $0x168] sm:$0xff]
                  %589 = vst [vmem:[%s529 + $0xe8] sm:$0xff] %v588
                  %v590 = vld [vmem:[%s528 + $0x170] sm:$0xff]
                  %591 = vst [vmem:[%s529 + $0xf0] sm:$0xff] %v590
                  %v592 = vld [vmem:[%s528 + $0x178] sm:$0xff]
                  %593 = vst [vmem:[%s529 + $0xf8] sm:$0xff] %v592
                  %v594 = vld [vmem:[%s528 + $0x200] sm:$0xff]
                  %595 = vst [vmem:[%s529 + $0x100] sm:$0xff] %v594
                  %v596 = vld [vmem:[%s528 + $0x208] sm:$0xff]
                  %597 = vst [vmem:[%s529 + $0x108] sm:$0xff] %v596
                  %v598 = vld [vmem:[%s528 + $0x210] sm:$0xff]
                  %599 = vst [vmem:[%s529 + $0x110] sm:$0xff] %v598
                  %v600 = vld [vmem:[%s528 + $0x218] sm:$0xff]
                  %601 = vst [vmem:[%s529 + $0x118] sm:$0xff] %v600
                  %v602 = vld [vmem:[%s528 + $0x220] sm:$0xff]
                  %603 = vst [vmem:[%s529 + $0x120] sm:$0xff] %v602
                  %v604 = vld [vmem:[%s528 + $0x228] sm:$0xff]
                  %605 = vst [vmem:[%s529 + $0x128] sm:$0xff] %v604
                  %v606 = vld [vmem:[%s528 + $0x230] sm:$0xff]
                  %607 = vst [vmem:[%s529 + $0x130] sm:$0xff] %v606
                  %v608 = vld [vmem:[%s528 + $0x238] sm:$0xff]
                  %609 = vst [vmem:[%s529 + $0x138] sm:$0xff] %v608
                  %v610 = vld [vmem:[%s528 + $0x240] sm:$0xff]
                  %611 = vst [vmem:[%s529 + $0x140] sm:$0xff] %v610
                  %v612 = vld [vmem:[%s528 + $0x248] sm:$0xff]
                  %613 = vst [vmem:[%s529 + $0x148] sm:$0xff] %v612
                  %v614 = vld [vmem:[%s528 + $0x250] sm:$0xff]
                  %615 = vst [vmem:[%s529 + $0x150] sm:$0xff] %v614
                  %v616 = vld [vmem:[%s528 + $0x258] sm:$0xff]
                  %617 = vst [vmem:[%s529 + $0x158] sm:$0xff] %v616
                  %v618 = vld [vmem:[%s528 + $0x260] sm:$0xff]
                  %619 = vst [vmem:[%s529 + $0x160] sm:$0xff] %v618
                  %v620 = vld [vmem:[%s528 + $0x268] sm:$0xff]
                  %621 = vst [vmem:[%s529 + $0x168] sm:$0xff] %v620
                  %v622 = vld [vmem:[%s528 + $0x270] sm:$0xff]
                  %623 = vst [vmem:[%s529 + $0x170] sm:$0xff] %v622
                  %v624 = vld [vmem:[%s528 + $0x278] sm:$0xff]
                  %625 = vst [vmem:[%s529 + $0x178] sm:$0xff] %v624
                  %v626 = vld [vmem:[%s528 + $0x300] sm:$0xff]
                  %627 = vst [vmem:[%s529 + $0x180] sm:$0xff] %v626
                  %v628 = vld [vmem:[%s528 + $0x308] sm:$0xff]
                  %629 = vst [vmem:[%s529 + $0x188] sm:$0xff] %v628
                  %v630 = vld [vmem:[%s528 + $0x310] sm:$0xff]
                  %631 = vst [vmem:[%s529 + $0x190] sm:$0xff] %v630
                  %v632 = vld [vmem:[%s528 + $0x318] sm:$0xff]
                  %633 = vst [vmem:[%s529 + $0x198] sm:$0xff] %v632
                  %v634 = vld [vmem:[%s528 + $0x320] sm:$0xff]
                  %635 = vst [vmem:[%s529 + $0x1a0] sm:$0xff] %v634
                  %v636 = vld [vmem:[%s528 + $0x328] sm:$0xff]
                  %637 = vst [vmem:[%s529 + $0x1a8] sm:$0xff] %v636
                  %v638 = vld [vmem:[%s528 + $0x330] sm:$0xff]
                  %639 = vst [vmem:[%s529 + $0x1b0] sm:$0xff] %v638
                  %v640 = vld [vmem:[%s528 + $0x338] sm:$0xff]
                  %641 = vst [vmem:[%s529 + $0x1b8] sm:$0xff] %v640
                  %v642 = vld [vmem:[%s528 + $0x340] sm:$0xff]
                  %643 = vst [vmem:[%s529 + $0x1c0] sm:$0xff] %v642
                  %v644 = vld [vmem:[%s528 + $0x348] sm:$0xff]
                  %645 = vst [vmem:[%s529 + $0x1c8] sm:$0xff] %v644
                  %v646 = vld [vmem:[%s528 + $0x350] sm:$0xff]
                  %647 = vst [vmem:[%s529 + $0x1d0] sm:$0xff] %v646
                  %v648 = vld [vmem:[%s528 + $0x358] sm:$0xff]
                  %649 = vst [vmem:[%s529 + $0x1d8] sm:$0xff] %v648
                  %v650 = vld [vmem:[%s528 + $0x360] sm:$0xff]
                  %651 = vst [vmem:[%s529 + $0x1e0] sm:$0xff] %v650
                  %v652 = vld [vmem:[%s528 + $0x368] sm:$0xff]
                  %653 = vst [vmem:[%s529 + $0x1e8] sm:$0xff] %v652
                  %v654 = vld [vmem:[%s528 + $0x370] sm:$0xff]
                  %655 = vst [vmem:[%s529 + $0x1f0] sm:$0xff] %v654
                  %v656 = vld [vmem:[%s528 + $0x378] sm:$0xff]
                  %657 = vst [vmem:[%s529 + $0x1f8] sm:$0xff] %v656
                $region92: #{tpu_custom_call.1} parent=86 // loop_footer
                  %s527 = sadd.s32 1, %s523
                $region93: #{tpu_custom_call.1} parent=86 // loop_footer_branch
                  %522 = sbr.rel target = $region89
                $region94: #{tpu_custom_call.1} parent=86 // loop_exit
                  _
              $region87: #{tpu_custom_call.1} parent=71 // pred_fallthru
                _
              // Predicated region
              $region95: #{tpu_custom_call.1} parent=71 // pred_check
                _
              $region96: #{tpu_custom_call.1} parent=71 // pred_check_branch
                %659 = sbr.rel target = $region98
              $region97: #{tpu_custom_call.1} parent=71 // pred_region
                _
              $region98: #{tpu_custom_call.1} parent=71 // pred_fallthru
                _
            $region72: #{tpu_custom_call.1} parent=67 // pred_fallthru
              _
            // Predicated region
            $region73: #{tpu_custom_call.1} parent=67 // pred_check
              _
            $region74: #{tpu_custom_call.1} parent=67 // pred_check_branch
              %382 = sbr.rel target = $region76
            $region75: #{tpu_custom_call.1} parent=67 // pred_region
              loop: start=0, step=1, limit=1
              $region77: #{tpu_custom_call.1} parent=75 // loop_pre_header
                _
              $region78: #{tpu_custom_call.1} parent=75 // loop_header
                %s385 = sphi 0, %s389
                %p386 = scmp.ge.s32.totalorder %s385, 1
                %s390 = sphi %s376, %s376
                %s391 = sphi %s373, %s373
              $region79: #{tpu_custom_call.1} parent=75 // loop_header_branch
                %388 = sbr.rel (%p386) target = $region83
              $region80: #{tpu_custom_call.1} parent=75 // loop_body
                %v392 = vld [vmem:[%s390] sm:$0xff]
                %393 = vst [vmem:[%s391] sm:$0xff] %v392
                %v394 = vld [vmem:[%s390 + $0x8] sm:$0xff]
                %395 = vst [vmem:[%s391 + $0x8] sm:$0xff] %v394
                %v396 = vld [vmem:[%s390 + $0x10] sm:$0xff]
                %397 = vst [vmem:[%s391 + $0x10] sm:$0xff] %v396
                %v398 = vld [vmem:[%s390 + $0x18] sm:$0xff]
                %399 = vst [vmem:[%s391 + $0x18] sm:$0xff] %v398
                %v400 = vld [vmem:[%s390 + $0x20] sm:$0xff]
                %401 = vst [vmem:[%s391 + $0x20] sm:$0xff] %v400
                %v402 = vld [vmem:[%s390 + $0x28] sm:$0xff]
                %403 = vst [vmem:[%s391 + $0x28] sm:$0xff] %v402
                %v404 = vld [vmem:[%s390 + $0x30] sm:$0xff]
                %405 = vst [vmem:[%s391 + $0x30] sm:$0xff] %v404
                %v406 = vld [vmem:[%s390 + $0x38] sm:$0xff]
                %407 = vst [vmem:[%s391 + $0x38] sm:$0xff] %v406
                %v408 = vld [vmem:[%s390 + $0x40] sm:$0xff]
                %409 = vst [vmem:[%s391 + $0x40] sm:$0xff] %v408
                %v410 = vld [vmem:[%s390 + $0x48] sm:$0xff]
                %411 = vst [vmem:[%s391 + $0x48] sm:$0xff] %v410
                %v412 = vld [vmem:[%s390 + $0x50] sm:$0xff]
                %413 = vst [vmem:[%s391 + $0x50] sm:$0xff] %v412
                %v414 = vld [vmem:[%s390 + $0x58] sm:$0xff]
                %415 = vst [vmem:[%s391 + $0x58] sm:$0xff] %v414
                %v416 = vld [vmem:[%s390 + $0x60] sm:$0xff]
                %417 = vst [vmem:[%s391 + $0x60] sm:$0xff] %v416
                %v418 = vld [vmem:[%s390 + $0x68] sm:$0xff]
                %419 = vst [vmem:[%s391 + $0x68] sm:$0xff] %v418
                %v420 = vld [vmem:[%s390 + $0x70] sm:$0xff]
                %421 = vst [vmem:[%s391 + $0x70] sm:$0xff] %v420
                %v422 = vld [vmem:[%s390 + $0x78] sm:$0xff]
                %423 = vst [vmem:[%s391 + $0x78] sm:$0xff] %v422
                %v424 = vld [vmem:[%s390 + $0x100] sm:$0xff]
                %425 = vst [vmem:[%s391 + $0x80] sm:$0xff] %v424
                %v426 = vld [vmem:[%s390 + $0x108] sm:$0xff]
                %427 = vst [vmem:[%s391 + $0x88] sm:$0xff] %v426
                %v428 = vld [vmem:[%s390 + $0x110] sm:$0xff]
                %429 = vst [vmem:[%s391 + $0x90] sm:$0xff] %v428
                %v430 = vld [vmem:[%s390 + $0x118] sm:$0xff]
                %431 = vst [vmem:[%s391 + $0x98] sm:$0xff] %v430
                %v432 = vld [vmem:[%s390 + $0x120] sm:$0xff]
                %433 = vst [vmem:[%s391 + $0xa0] sm:$0xff] %v432
                %v434 = vld [vmem:[%s390 + $0x128] sm:$0xff]
                %435 = vst [vmem:[%s391 + $0xa8] sm:$0xff] %v434
                %v436 = vld [vmem:[%s390 + $0x130] sm:$0xff]
                %437 = vst [vmem:[%s391 + $0xb0] sm:$0xff] %v436
                %v438 = vld [vmem:[%s390 + $0x138] sm:$0xff]
                %439 = vst [vmem:[%s391 + $0xb8] sm:$0xff] %v438
                %v440 = vld [vmem:[%s390 + $0x140] sm:$0xff]
                %441 = vst [vmem:[%s391 + $0xc0] sm:$0xff] %v440
                %v442 = vld [vmem:[%s390 + $0x148] sm:$0xff]
                %443 = vst [vmem:[%s391 + $0xc8] sm:$0xff] %v442
                %v444 = vld [vmem:[%s390 + $0x150] sm:$0xff]
                %445 = vst [vmem:[%s391 + $0xd0] sm:$0xff] %v444
                %v446 = vld [vmem:[%s390 + $0x158] sm:$0xff]
                %447 = vst [vmem:[%s391 + $0xd8] sm:$0xff] %v446
                %v448 = vld [vmem:[%s390 + $0x160] sm:$0xff]
                %449 = vst [vmem:[%s391 + $0xe0] sm:$0xff] %v448
                %v450 = vld [vmem:[%s390 + $0x168] sm:$0xff]
                %451 = vst [vmem:[%s391 + $0xe8] sm:$0xff] %v450
                %v452 = vld [vmem:[%s390 + $0x170] sm:$0xff]
                %453 = vst [vmem:[%s391 + $0xf0] sm:$0xff] %v452
                %v454 = vld [vmem:[%s390 + $0x178] sm:$0xff]
                %455 = vst [vmem:[%s391 + $0xf8] sm:$0xff] %v454
                %v456 = vld [vmem:[%s390 + $0x200] sm:$0xff]
                %457 = vst [vmem:[%s391 + $0x100] sm:$0xff] %v456
                %v458 = vld [vmem:[%s390 + $0x208] sm:$0xff]
                %459 = vst [vmem:[%s391 + $0x108] sm:$0xff] %v458
                %v460 = vld [vmem:[%s390 + $0x210] sm:$0xff]
                %461 = vst [vmem:[%s391 + $0x110] sm:$0xff] %v460
                %v462 = vld [vmem:[%s390 + $0x218] sm:$0xff]
                %463 = vst [vmem:[%s391 + $0x118] sm:$0xff] %v462
                %v464 = vld [vmem:[%s390 + $0x220] sm:$0xff]
                %465 = vst [vmem:[%s391 + $0x120] sm:$0xff] %v464
                %v466 = vld [vmem:[%s390 + $0x228] sm:$0xff]
                %467 = vst [vmem:[%s391 + $0x128] sm:$0xff] %v466
                %v468 = vld [vmem:[%s390 + $0x230] sm:$0xff]
                %469 = vst [vmem:[%s391 + $0x130] sm:$0xff] %v468
                %v470 = vld [vmem:[%s390 + $0x238] sm:$0xff]
                %471 = vst [vmem:[%s391 + $0x138] sm:$0xff] %v470
                %v472 = vld [vmem:[%s390 + $0x240] sm:$0xff]
                %473 = vst [vmem:[%s391 + $0x140] sm:$0xff] %v472
                %v474 = vld [vmem:[%s390 + $0x248] sm:$0xff]
                %475 = vst [vmem:[%s391 + $0x148] sm:$0xff] %v474
                %v476 = vld [vmem:[%s390 + $0x250] sm:$0xff]
                %477 = vst [vmem:[%s391 + $0x150] sm:$0xff] %v476
                %v478 = vld [vmem:[%s390 + $0x258] sm:$0xff]
                %479 = vst [vmem:[%s391 + $0x158] sm:$0xff] %v478
                %v480 = vld [vmem:[%s390 + $0x260] sm:$0xff]
                %481 = vst [vmem:[%s391 + $0x160] sm:$0xff] %v480
                %v482 = vld [vmem:[%s390 + $0x268] sm:$0xff]
                %483 = vst [vmem:[%s391 + $0x168] sm:$0xff] %v482
                %v484 = vld [vmem:[%s390 + $0x270] sm:$0xff]
                %485 = vst [vmem:[%s391 + $0x170] sm:$0xff] %v484
                %v486 = vld [vmem:[%s390 + $0x278] sm:$0xff]
                %487 = vst [vmem:[%s391 + $0x178] sm:$0xff] %v486
                %v488 = vld [vmem:[%s390 + $0x300] sm:$0xff]
                %489 = vst [vmem:[%s391 + $0x180] sm:$0xff] %v488
                %v490 = vld [vmem:[%s390 + $0x308] sm:$0xff]
                %491 = vst [vmem:[%s391 + $0x188] sm:$0xff] %v490
                %v492 = vld [vmem:[%s390 + $0x310] sm:$0xff]
                %493 = vst [vmem:[%s391 + $0x190] sm:$0xff] %v492
                %v494 = vld [vmem:[%s390 + $0x318] sm:$0xff]
                %495 = vst [vmem:[%s391 + $0x198] sm:$0xff] %v494
                %v496 = vld [vmem:[%s390 + $0x320] sm:$0xff]
                %497 = vst [vmem:[%s391 + $0x1a0] sm:$0xff] %v496
                %v498 = vld [vmem:[%s390 + $0x328] sm:$0xff]
                %499 = vst [vmem:[%s391 + $0x1a8] sm:$0xff] %v498
                %v500 = vld [vmem:[%s390 + $0x330] sm:$0xff]
                %501 = vst [vmem:[%s391 + $0x1b0] sm:$0xff] %v500
                %v502 = vld [vmem:[%s390 + $0x338] sm:$0xff]
                %503 = vst [vmem:[%s391 + $0x1b8] sm:$0xff] %v502
                %v504 = vld [vmem:[%s390 + $0x340] sm:$0xff]
                %505 = vst [vmem:[%s391 + $0x1c0] sm:$0xff] %v504
                %v506 = vld [vmem:[%s390 + $0x348] sm:$0xff]
                %507 = vst [vmem:[%s391 + $0x1c8] sm:$0xff] %v506
                %v508 = vld [vmem:[%s390 + $0x350] sm:$0xff]
                %509 = vst [vmem:[%s391 + $0x1d0] sm:$0xff] %v508
                %v510 = vld [vmem:[%s390 + $0x358] sm:$0xff]
                %511 = vst [vmem:[%s391 + $0x1d8] sm:$0xff] %v510
                %v512 = vld [vmem:[%s390 + $0x360] sm:$0xff]
                %513 = vst [vmem:[%s391 + $0x1e0] sm:$0xff] %v512
                %v514 = vld [vmem:[%s390 + $0x368] sm:$0xff]
                %515 = vst [vmem:[%s391 + $0x1e8] sm:$0xff] %v514
                %v516 = vld [vmem:[%s390 + $0x370] sm:$0xff]
                %517 = vst [vmem:[%s391 + $0x1f0] sm:$0xff] %v516
                %v518 = vld [vmem:[%s390 + $0x378] sm:$0xff]
                %519 = vst [vmem:[%s391 + $0x1f8] sm:$0xff] %v518
              $region81: #{tpu_custom_call.1} parent=75 // loop_footer
                %s389 = sadd.s32 1, %s385
              $region82: #{tpu_custom_call.1} parent=75 // loop_footer_branch
                %384 = sbr.rel target = $region78
              $region83: #{tpu_custom_call.1} parent=75 // loop_exit
                _
            $region76: #{tpu_custom_call.1} parent=67 // pred_fallthru
              _
          $region68: #{tpu_custom_call.1} parent=63 // pred_fallthru
            _
          %660 = vnop
        $region64: #{tpu_custom_call.1} parent=55 // pred_fallthru
          _
      $region56: #{tpu_custom_call.1} parent=5 // pred_fallthru
        _
      %p661 = scmp.le.s32.totalorder 1, %s21
      %p662 = scmp.lt.s32.totalorder %s21, 3
      %p663 = pnand %p661, %p662
      %p664 = pneg %p663
      // Predicated region
      $region99: #{tpu_custom_call.1} parent=5 // pred_check
        _
      $region100: #{tpu_custom_call.1} parent=5 // pred_check_branch
        %666 = sbr.rel (%p663) target = $region102
      $region101: #{tpu_custom_call.1} parent=5 // pred_region
        %s667 = ssub.s32 %s21, 1
        %s668 = sand.u32 %s60, 1
        %s669 = sand.u32 %s60, 1
        %s670 = smul.addr %s669, 512
        %s671 = scalar_lea.vmem [#allocation2], %s670
        // Predicated region
        $region103: #{tpu_custom_call.1} parent=101 // pred_check
          %p672 = pneg %p73
        $region104: #{tpu_custom_call.1} parent=101 // pred_check_branch
          %674 = sbr.rel (%p672) target = $region106
        $region105: #{tpu_custom_call.1} parent=101 // pred_region
          _
        $region106: #{tpu_custom_call.1} parent=101 // pred_fallthru
          _
        %s675 = smul.u32 16, %s26
        %p676 = scmp.lt.s32.totalorder %s675, 31
        %s677 = scalar_select %p676, %s675, 31
        %s678 = smul.addr %s677, 8
        %s679 = scalar_lea.vmem %s0, %s678
        %p680 = pneg %p47
        %p681 = pneg %p44
        %s682 = sand.u32 %s60, 1
        %s683 = sand.u32 %s60, 1
        %s684 = smul.addr %s683, 512
        %s685 = scalar_lea.vmem [#allocation2], %s684
        %p686 = pneg %p73
        %p687 = pneg %p70
        %p688 = pneg %p94
        %p689 = pneg %p91
        %p690 = pneg %p115
        %p691 = pneg %p112
        %p692 = pneg %p136
        %p693 = pneg %p133
        %p694 = pneg %p157
        %p695 = pneg %p154
        %p696 = pneg %p178
        %p697 = pneg %p175
        %p698 = pneg %p199
        %p699 = pneg %p196
        %p700 = pneg %p220
        %p701 = pneg %p217
        %p702 = pneg %p241
        %p703 = pneg %p238
        %p704 = pneg %p262
        %p705 = pneg %p259
        %p706 = pneg %p283
        %p707 = pneg %p280
        %p708 = pneg %p309
        %p709 = pneg %p306
        %s710 = sand.u32 %s296, 1
        %s711 = scalar_lea.sflag [#allocation4], %s710
        %s712 = sand.u32 %s296, 1
        %s713 = smul.addr %s712, 128
        %s714 = scalar_lea.vmem [#allocation3], %s713
        %s715 = smul.u32 16, %s26
        %p716 = scmp.lt.s32.totalorder %s715, 31
        %s717 = scalar_select %p716, %s715, 31
        %s718 = smul.addr %s717, 8
        %s719 = scalar_lea.vmem %s0, %s718
        %s720 = smul.u32 16, %s26
        %s721 = smul.u32 16, %s26
        %s722 = smul.u32 16, %s26
        %v723 = vld [vmem:[%s719] sm:$0xff]
        %v724 = vld [vmem:[%s719 + $0x8] sm:$0xff]
        %v725 = vld [vmem:[%s719 + $0x10] sm:$0xff]
        %v726 = vld [vmem:[%s719 + $0x18] sm:$0xff]
        %v727 = vld [vmem:[%s719 + $0x20] sm:$0xff]
        %v728 = vld [vmem:[%s719 + $0x28] sm:$0xff]
        %v729 = vld [vmem:[%s719 + $0x30] sm:$0xff]
        %v730 = vld [vmem:[%s719 + $0x38] sm:$0xff]
        %v731 = vld [vmem:[%s719 + $0x40] sm:$0xff]
        %v732 = vld [vmem:[%s719 + $0x48] sm:$0xff]
        %v733 = vld [vmem:[%s719 + $0x50] sm:$0xff]
        %v734 = vld [vmem:[%s719 + $0x58] sm:$0xff]
        %v735 = vld [vmem:[%s719 + $0x60] sm:$0xff]
        %v736 = vld [vmem:[%s719 + $0x68] sm:$0xff]
        %v737 = vld [vmem:[%s719 + $0x70] sm:$0xff]
        %v738 = vld [vmem:[%s719 + $0x78] sm:$0xff]
        %v739 = vld [vmem:[%s671] sm:$0xff]
        %v740 = vld [vmem:[%s671 + $0x8] sm:$0xff]
        %v741 = vld [vmem:[%s671 + $0x10] sm:$0xff]
        %v742 = vld [vmem:[%s671 + $0x18] sm:$0xff]
        %v743 = vld [vmem:[%s671 + $0x20] sm:$0xff]
        %v744 = vld [vmem:[%s671 + $0x28] sm:$0xff]
        %v745 = vld [vmem:[%s671 + $0x30] sm:$0xff]
        %v746 = vld [vmem:[%s671 + $0x38] sm:$0xff]
        %v747 = vld [vmem:[%s671 + $0x40] sm:$0xff]
        %v748 = vld [vmem:[%s671 + $0x48] sm:$0xff]
        %v749 = vld [vmem:[%s671 + $0x50] sm:$0xff]
        %v750 = vld [vmem:[%s671 + $0x58] sm:$0xff]
        %v751 = vld [vmem:[%s671 + $0x60] sm:$0xff]
        %v752 = vld [vmem:[%s671 + $0x68] sm:$0xff]
        %v753 = vld [vmem:[%s671 + $0x70] sm:$0xff]
        %v754 = vld [vmem:[%s671 + $0x78] sm:$0xff]
        %s755 = scalar_lea.vmem %s671, 128 [#allocation2]
        %v756 = vld [vmem:[%s755] sm:$0xff]
        %v757 = vld [vmem:[%s755 + $0x8] sm:$0xff]
        %v758 = vld [vmem:[%s755 + $0x10] sm:$0xff]
        %v759 = vld [vmem:[%s755 + $0x18] sm:$0xff]
        %v760 = vld [vmem:[%s755 + $0x20] sm:$0xff]
        %v761 = vld [vmem:[%s755 + $0x28] sm:$0xff]
        %v762 = vld [vmem:[%s755 + $0x30] sm:$0xff]
        %v763 = vld [vmem:[%s755 + $0x38] sm:$0xff]
        %v764 = vld [vmem:[%s755 + $0x40] sm:$0xff]
        %v765 = vld [vmem:[%s755 + $0x48] sm:$0xff]
        %v766 = vld [vmem:[%s755 + $0x50] sm:$0xff]
        %v767 = vld [vmem:[%s755 + $0x58] sm:$0xff]
        %v768 = vld [vmem:[%s755 + $0x60] sm:$0xff]
        %v769 = vld [vmem:[%s755 + $0x68] sm:$0xff]
        %v770 = vld [vmem:[%s755 + $0x70] sm:$0xff]
        %v771 = vld [vmem:[%s755 + $0x78] sm:$0xff]
        %s772 = scalar_lea.vmem %s671, 256 [#allocation2]
        %v773 = vld [vmem:[%s772] sm:$0xff]
        %v774 = vld [vmem:[%s772 + $0x8] sm:$0xff]
        %v775 = vld [vmem:[%s772 + $0x10] sm:$0xff]
        %v776 = vld [vmem:[%s772 + $0x18] sm:$0xff]
        %v777 = vld [vmem:[%s772 + $0x20] sm:$0xff]
        %v778 = vld [vmem:[%s772 + $0x28] sm:$0xff]
        %v779 = vld [vmem:[%s772 + $0x30] sm:$0xff]
        %v780 = vld [vmem:[%s772 + $0x38] sm:$0xff]
        %v781 = vld [vmem:[%s772 + $0x40] sm:$0xff]
        %v782 = vld [vmem:[%s772 + $0x48] sm:$0xff]
        %v783 = vld [vmem:[%s772 + $0x50] sm:$0xff]
        %v784 = vld [vmem:[%s772 + $0x58] sm:$0xff]
        %v785 = vld [vmem:[%s772 + $0x60] sm:$0xff]
        %v786 = vld [vmem:[%s772 + $0x68] sm:$0xff]
        %v787 = vld [vmem:[%s772 + $0x70] sm:$0xff]
        %v788 = vld [vmem:[%s772 + $0x78] sm:$0xff]
        %s789 = scalar_lea.vmem %s671, 384 [#allocation2]
        %v790 = vld [vmem:[%s789] sm:$0xff]
        %v791 = vld [vmem:[%s789 + $0x8] sm:$0xff]
        %v792 = vld [vmem:[%s789 + $0x10] sm:$0xff]
        %v793 = vld [vmem:[%s789 + $0x18] sm:$0xff]
        %v794 = vld [vmem:[%s789 + $0x20] sm:$0xff]
        %v795 = vld [vmem:[%s789 + $0x28] sm:$0xff]
        %v796 = vld [vmem:[%s789 + $0x30] sm:$0xff]
        %v797 = vld [vmem:[%s789 + $0x38] sm:$0xff]
        %v798 = vld [vmem:[%s789 + $0x40] sm:$0xff]
        %v799 = vld [vmem:[%s789 + $0x48] sm:$0xff]
        %v800 = vld [vmem:[%s789 + $0x50] sm:$0xff]
        %v801 = vld [vmem:[%s789 + $0x58] sm:$0xff]
        %v802 = vld [vmem:[%s789 + $0x60] sm:$0xff]
        %v803 = vld [vmem:[%s789 + $0x68] sm:$0xff]
        %v804 = vld [vmem:[%s789 + $0x70] sm:$0xff]
        %v805 = vld [vmem:[%s789 + $0x78] sm:$0xff]
        %v806 = vld [vmem:[%s2] sm:$0xff]
        %v807 = vld [vmem:[%s2 + $0x8] sm:$0xff]
        %v808 = vld [vmem:[%s2 + $0x10] sm:$0xff]
        %v809 = vld [vmem:[%s2 + $0x18] sm:$0xff]
        %v810 = vld [vmem:[%s2 + $0x20] sm:$0xff]
        %v811 = vld [vmem:[%s2 + $0x28] sm:$0xff]
        %v812 = vld [vmem:[%s2 + $0x30] sm:$0xff]
        %v813 = vld [vmem:[%s2 + $0x38] sm:$0xff]
        %v814 = vld [vmem:[%s4] sm:$0x1]
        %v816 = vlaneseq
        %v817 = vshrl.u32 %v816, 7
        %v818 = vsub.s32 0, %v817
        %v819 = vrot.slane %v814, %v818
        %vm821 = vcmask 523264
        %v823 = vsel %vm821, %v723, 0
        %v826 = vsel %vm821, %v724, 0
        %v829 = vsel %vm821, %v725, 0
        %v832 = vsel %vm821, %v726, 0
        %v835 = vsel %vm821, %v727, 0
        %v838 = vsel %vm821, %v728, 0
        %v841 = vsel %vm821, %v729, 0
        %v844 = vsel %vm821, %v730, 0
        %v847 = vsel %vm821, %v731, 0
        %v850 = vsel %vm821, %v732, 0
        %v853 = vsel %vm821, %v733, 0
        %v856 = vsel %vm821, %v734, 0
        %v859 = vsel %vm821, %v735, 0
        %v862 = vsel %vm821, %v736, 0
        %v865 = vsel %vm821, %v737, 0
        %v868 = vsel %vm821, %v738, 0
        %870 = vmatprep.subr.mxu0 0.0
        %871 = vmatpush1.msra.mxu0 %v806
        %872 = vmatprep.subr.mxu0 0.0
        %873 = vmatpush1.msra.mxu0 %v807
        %874 = vmatprep.subr.mxu0 0.0
        %875 = vmatpush1.msra.mxu0 %v808
        %876 = vmatprep.subr.mxu0 0.0
        %877 = vmatpush1.msra.mxu0 %v809
        %878 = vmatprep.subr.mxu0 0.0
        %879 = vmatpush1.msra.mxu0 %v810
        %880 = vmatprep.subr.mxu0 0.0
        %881 = vmatpush1.msra.mxu0 %v811
        %882 = vmatprep.subr.mxu0 0.0
        %883 = vmatpush1.msra.mxu0 %v812
        %884 = vmatprep.subr.mxu0 0.0
        %885 = vmatpush1.msra.mxu0 %v813
        %886 = vmatprep.subr.mxu0 0.0
        %887 = vmatpush1.msra.mxu0 0.0
        %888 = vmatprep.subr.mxu0 0.0
        %889 = vmatpush1.msra.mxu0 0.0
        %890 = vmatprep.subr.mxu0 0.0
        %891 = vmatpush1.msra.mxu0 0.0
        %892 = vmatprep.subr.mxu0 0.0
        %893 = vmatpush1.msra.mxu0 0.0
        %894 = vmatprep.subr.mxu0 0.0
        %895 = vmatpush1.msra.mxu0 0.0
        %896 = vmatprep.subr.mxu0 0.0
        %897 = vmatpush1.msra.mxu0 0.0
        %898 = vmatprep.subr.mxu0 0.0
        %899 = vmatpush1.msra.mxu0 0.0
        %900 = vmatprep.subr.mxu0 0.0
        %901 = vmatpush1.msra.mxu0 0.0
        %902 = vmatprep.subr.mxu0 0.0
        %903 = vmatpush1.msra.mxu0 0.0
        %904 = vmatprep.subr.mxu0 0.0
        %905 = vmatpush1.msra.mxu0 0.0
        %906 = vmatprep.subr.mxu0 0.0
        %907 = vmatpush1.msra.mxu0 0.0
        %908 = vmatprep.subr.mxu0 0.0
        %909 = vmatpush1.msra.mxu0 0.0
        %910 = vmatprep.subr.mxu0 0.0
        %911 = vmatpush1.msra.mxu0 0.0
        %912 = vmatprep.subr.mxu0 0.0
        %913 = vmatpush1.msra.mxu0 0.0
        %914 = vmatprep.subr.mxu0 0.0
        %915 = vmatpush1.msra.mxu0 0.0
        %916 = vmatprep.subr.mxu0 0.0
        %917 = vmatpush1.msra.mxu0 0.0
        %918 = vmatprep.subr.mxu0 0.0
        %919 = vmatpush1.msra.mxu0 0.0
        %920 = vmatprep.subr.mxu0 0.0
        %921 = vmatpush1.msra.mxu0 0.0
        %922 = vmatprep.subr.mxu0 0.0
        %923 = vmatpush1.msra.mxu0 0.0
        %924 = vmatprep.subr.mxu0 0.0
        %925 = vmatpush1.msra.mxu0 0.0
        %926 = vmatprep.subr.mxu0 0.0
        %927 = vmatpush1.msra.mxu0 0.0
        %928 = vmatprep.subr.mxu0 0.0
        %929 = vmatpush1.msra.mxu0 0.0
        %930 = vmatprep.subr.mxu0 0.0
        %931 = vmatpush1.msra.mxu0 0.0
        %932 = vmatprep.subr.mxu0 0.0
        %933 = vmatpush1.msra.mxu0 0.0
        %934 = vmatprep.mubr.f32.mxu0 0.0
        %935 = vmatmul.mubr.f32.gmra.mrb[0].mxu0 %v823
        %v936 = vpop.f32.mrb[0].mxu0
        %v937 = vadd.f32 %v819, %v936
        %v938 = vpop.f32.mrb[0].mxu0
        %939 = vmatprep.mubr.f32.mxu0 0.0
        %940 = vmatmul.mubr.f32.gmra.mrb[0].mxu0 %v826
        %v941 = vpop.f32.mrb[0].mxu0
        %v942 = vadd.f32 %v819, %v941
        %v943 = vpop.f32.mrb[0].mxu0
        %944 = vmatprep.mubr.f32.mxu0 0.0
        %945 = vmatmul.mubr.f32.gmra.mrb[0].mxu0 %v829
        %v946 = vpop.f32.mrb[0].mxu0
        %v947 = vadd.f32 %v819, %v946
        %v948 = vpop.f32.mrb[0].mxu0
        %949 = vmatprep.mubr.f32.mxu0 0.0
        %950 = vmatmul.mubr.f32.gmra.mrb[0].mxu0 %v832
        %v951 = vpop.f32.mrb[0].mxu0
        %v952 = vadd.f32 %v819, %v951
        %v953 = vpop.f32.mrb[0].mxu0
        %954 = vmatprep.mubr.f32.mxu0 0.0
        %955 = vmatmul.mubr.f32.gmra.mrb[0].mxu0 %v835
        %v956 = vpop.f32.mrb[0].mxu0
        %v957 = vadd.f32 %v819, %v956
        %v958 = vpop.f32.mrb[0].mxu0
        %959 = vmatprep.mubr.f32.mxu0 0.0
        %960 = vmatmul.mubr.f32.gmra.mrb[0].mxu0 %v838
        %v961 = vpop.f32.mrb[0].mxu0
        %v962 = vadd.f32 %v819, %v961
        %v963 = vpop.f32.mrb[0].mxu0
        %964 = vmatprep.mubr.f32.mxu0 0.0
        %965 = vmatmul.mubr.f32.gmra.mrb[0].mxu0 %v841
        %v966 = vpop.f32.mrb[0].mxu0
        %v967 = vadd.f32 %v819, %v966
        %v968 = vpop.f32.mrb[0].mxu0
        %969 = vmatprep.mubr.f32.mxu0 0.0
        %970 = vmatmul.mubr.f32.gmra.mrb[0].mxu0 %v844
        %v971 = vpop.f32.mrb[0].mxu0
        %v972 = vadd.f32 %v819, %v971
        %v973 = vpop.f32.mrb[0].mxu0
        %974 = vmatprep.mubr.f32.mxu0 0.0
        %975 = vmatmul.mubr.f32.gmra.mrb[0].mxu0 %v847
        %v976 = vpop.f32.mrb[0].mxu0
        %v977 = vadd.f32 %v819, %v976
        %v978 = vpop.f32.mrb[0].mxu0
        %979 = vmatprep.mubr.f32.mxu0 0.0
        %980 = vmatmul.mubr.f32.gmra.mrb[0].mxu0 %v850
        %v981 = vpop.f32.mrb[0].mxu0
        %v982 = vadd.f32 %v819, %v981
        %v983 = vpop.f32.mrb[0].mxu0
        %984 = vmatprep.mubr.f32.mxu0 0.0
        %985 = vmatmul.mubr.f32.gmra.mrb[0].mxu0 %v853
        %v986 = vpop.f32.mrb[0].mxu0
        %v987 = vadd.f32 %v819, %v986
        %v988 = vpop.f32.mrb[0].mxu0
        %989 = vmatprep.mubr.f32.mxu0 0.0
        %990 = vmatmul.mubr.f32.gmra.mrb[0].mxu0 %v856
        %v991 = vpop.f32.mrb[0].mxu0
        %v992 = vadd.f32 %v819, %v991
        %v993 = vpop.f32.mrb[0].mxu0
        %994 = vmatprep.mubr.f32.mxu0 0.0
        %995 = vmatmul.mubr.f32.gmra.mrb[0].mxu0 %v859
        %v996 = vpop.f32.mrb[0].mxu0
        %v997 = vadd.f32 %v819, %v996
        %v998 = vpop.f32.mrb[0].mxu0
        %999 = vmatprep.mubr.f32.mxu0 0.0
        %1000 = vmatmul.mubr.f32.gmra.mrb[0].mxu0 %v862
        %v1001 = vpop.f32.mrb[0].mxu0
        %v1002 = vadd.f32 %v819, %v1001
        %v1003 = vpop.f32.mrb[0].mxu0
        %1004 = vmatprep.mubr.f32.mxu0 0.0
        %1005 = vmatmul.mubr.f32.gmra.mrb[0].mxu0 %v865
        %v1006 = vpop.f32.mrb[0].mxu0
        %v1007 = vadd.f32 %v819, %v1006
        %v1008 = vpop.f32.mrb[0].mxu0
        %1009 = vmatprep.mubr.f32.mxu0 0.0
        %1010 = vmatmul.mubr.f32.gmra.mrb[0].mxu0 %v868
        %v1011 = vpop.f32.mrb[0].mxu0
        %v1012 = vadd.f32 %v819, %v1011
        %v1013 = vpop.f32.mrb[0].mxu0
        %1014 = vdwg.mxu0
        %v1015 = vld [vmem:[%s3] sm:$0xff]
        %v1016 = vld [vmem:[%s3 + $0x8] sm:$0xff]
        %v1017 = vld [vmem:[%s3 + $0x10] sm:$0xff]
        %v1018 = vld [vmem:[%s3 + $0x18] sm:$0xff]
        %v1019 = vld [vmem:[%s3 + $0x20] sm:$0xff]
        %v1020 = vld [vmem:[%s3 + $0x28] sm:$0xff]
        %v1021 = vld [vmem:[%s3 + $0x30] sm:$0xff]
        %v1022 = vld [vmem:[%s3 + $0x38] sm:$0xff]
        %v1024 = vsel %vm821, %v739, 0
        %v1027 = vsel %vm821, %v740, 0
        %v1030 = vsel %vm821, %v741, 0
        %v1033 = vsel %vm821, %v742, 0
        %v1036 = vsel %vm821, %v743, 0
        %v1039 = vsel %vm821, %v744, 0
        %v1042 = vsel %vm821, %v745, 0
        %v1045 = vsel %vm821, %v746, 0
        %v1048 = vsel %vm821, %v747, 0
        %v1051 = vsel %vm821, %v748, 0
        %v1054 = vsel %vm821, %v749, 0
        %v1057 = vsel %vm821, %v750, 0
        %v1060 = vsel %vm821, %v751, 0
        %v1063 = vsel %vm821, %v752, 0
        %v1066 = vsel %vm821, %v753, 0
        %v1069 = vsel %vm821, %v754, 0
        %1071 = vmatprep.subr.mxu0 0.0
        %1072 = vmatpush1.msra.mxu0 %v1015
        %1073 = vmatprep.subr.mxu0 0.0
        %1074 = vmatpush1.msra.mxu0 %v1016
        %1075 = vmatprep.subr.mxu0 0.0
        %1076 = vmatpush1.msra.mxu0 %v1017
        %1077 = vmatprep.subr.mxu0 0.0
        %1078 = vmatpush1.msra.mxu0 %v1018
        %1079 = vmatprep.subr.mxu0 0.0
        %1080 = vmatpush1.msra.mxu0 %v1019
        %1081 = vmatprep.subr.mxu0 0.0
        %1082 = vmatpush1.msra.mxu0 %v1020
        %1083 = vmatprep.subr.mxu0 0.0
        %1084 = vmatpush1.msra.mxu0 %v1021
        %1085 = vmatprep.subr.mxu0 0.0
        %1086 = vmatpush1.msra.mxu0 %v1022
        %1087 = vmatprep.subr.mxu0 0.0
        %1088 = vmatpush1.msra.mxu0 0.0
        %1089 = vmatprep.subr.mxu0 0.0
        %1090 = vmatpush1.msra.mxu0 0.0
        %1091 = vmatprep.subr.mxu0 0.0
        %1092 = vmatpush1.msra.mxu0 0.0
        %1093 = vmatprep.subr.mxu0 0.0
        %1094 = vmatpush1.msra.mxu0 0.0
        %1095 = vmatprep.subr.mxu0 0.0
        %1096 = vmatpush1.msra.mxu0 0.0
        %1097 = vmatprep.subr.mxu0 0.0
        %1098 = vmatpush1.msra.mxu0 0.0
        %1099 = vmatprep.subr.mxu0 0.0
        %1100 = vmatpush1.msra.mxu0 0.0
        %1101 = vmatprep.subr.mxu0 0.0
        %1102 = vmatpush1.msra.mxu0 0.0
        %1103 = vmatprep.subr.mxu0 0.0
        %1104 = vmatpush1.msra.mxu0 0.0
        %1105 = vmatprep.subr.mxu0 0.0
        %1106 = vmatpush1.msra.mxu0 0.0
        %1107 = vmatprep.subr.mxu0 0.0
        %1108 = vmatpush1.msra.mxu0 0.0
        %1109 = vmatprep.subr.mxu0 0.0
        %1110 = vmatpush1.msra.mxu0 0.0
        %1111 = vmatprep.subr.mxu0 0.0
        %1112 = vmatpush1.msra.mxu0 0.0
        %1113 = vmatprep.subr.mxu0 0.0
        %1114 = vmatpush1.msra.mxu0 0.0
        %1115 = vmatprep.subr.mxu0 0.0
        %1116 = vmatpush1.msra.mxu0 0.0
        %1117 = vmatprep.subr.mxu0 0.0
        %1118 = vmatpush1.msra.mxu0 0.0
        %1119 = vmatprep.subr.mxu0 0.0
        %1120 = vmatpush1.msra.mxu0 0.0
        %1121 = vmatprep.subr.mxu0 0.0
        %1122 = vmatpush1.msra.mxu0 0.0
        %1123 = vmatprep.subr.mxu0 0.0
        %1124 = vmatpush1.msra.mxu0 0.0
        %1125 = vmatprep.subr.mxu0 0.0
        %1126 = vmatpush1.msra.mxu0 0.0
        %1127 = vmatprep.subr.mxu0 0.0
        %1128 = vmatpush1.msra.mxu0 0.0
        %1129 = vmatprep.subr.mxu0 0.0
        %1130 = vmatpush1.msra.mxu0 0.0
        %1131 = vmatprep.subr.mxu0 0.0
        %1132 = vmatpush1.msra.mxu0 0.0
        %1133 = vmatprep.subr.mxu0 0.0
        %1134 = vmatpush1.msra.mxu0 0.0
        %1135 = vmatprep.mubr.f32.mxu0 0.0
        %1136 = vmatmul.mubr.f32.gmra.mrb[0].mxu0 %v1024
        %v1137 = vpop.f32.mrb[0].mxu0
        %v1138 = vadd.f32 0.0, %v1137
        %v1139 = vpop.f32.mrb[0].mxu0
        %1140 = vmatprep.mubr.f32.mxu0 0.0
        %1141 = vmatmul.mubr.f32.gmra.mrb[0].mxu0 %v1027
        %v1142 = vpop.f32.mrb[0].mxu0
        %v1143 = vadd.f32 0.0, %v1142
        %v1144 = vpop.f32.mrb[0].mxu0
        %1145 = vmatprep.mubr.f32.mxu0 0.0
        %1146 = vmatmul.mubr.f32.gmra.mrb[0].mxu0 %v1030
        %v1147 = vpop.f32.mrb[0].mxu0
        %v1148 = vadd.f32 0.0, %v1147
        %v1149 = vpop.f32.mrb[0].mxu0
        %1150 = vmatprep.mubr.f32.mxu0 0.0
        %1151 = vmatmul.mubr.f32.gmra.mrb[0].mxu0 %v1033
        %v1152 = vpop.f32.mrb[0].mxu0
        %v1153 = vadd.f32 0.0, %v1152
        %v1154 = vpop.f32.mrb[0].mxu0
        %1155 = vmatprep.mubr.f32.mxu0 0.0
        %1156 = vmatmul.mubr.f32.gmra.mrb[0].mxu0 %v1036
        %v1157 = vpop.f32.mrb[0].mxu0
        %v1158 = vadd.f32 0.0, %v1157
        %v1159 = vpop.f32.mrb[0].mxu0
        %1160 = vmatprep.mubr.f32.mxu0 0.0
        %1161 = vmatmul.mubr.f32.gmra.mrb[0].mxu0 %v1039
        %v1162 = vpop.f32.mrb[0].mxu0
        %v1163 = vadd.f32 0.0, %v1162
        %v1164 = vpop.f32.mrb[0].mxu0
        %1165 = vmatprep.mubr.f32.mxu0 0.0
        %1166 = vmatmul.mubr.f32.gmra.mrb[0].mxu0 %v1042
        %v1167 = vpop.f32.mrb[0].mxu0
        %v1168 = vadd.f32 0.0, %v1167
        %v1169 = vpop.f32.mrb[0].mxu0
        %1170 = vmatprep.mubr.f32.mxu0 0.0
        %1171 = vmatmul.mubr.f32.gmra.mrb[0].mxu0 %v1045
        %v1172 = vpop.f32.mrb[0].mxu0
        %v1173 = vadd.f32 0.0, %v1172
        %v1174 = vpop.f32.mrb[0].mxu0
        %1175 = vmatprep.mubr.f32.mxu0 0.0
        %1176 = vmatmul.mubr.f32.gmra.mrb[0].mxu0 %v1048
        %v1177 = vpop.f32.mrb[0].mxu0
        %v1178 = vadd.f32 0.0, %v1177
        %v1179 = vpop.f32.mrb[0].mxu0
        %1180 = vmatprep.mubr.f32.mxu0 0.0
        %1181 = vmatmul.mubr.f32.gmra.mrb[0].mxu0 %v1051
        %v1182 = vpop.f32.mrb[0].mxu0
        %v1183 = vadd.f32 0.0, %v1182
        %v1184 = vpop.f32.mrb[0].mxu0
        %1185 = vmatprep.mubr.f32.mxu0 0.0
        %1186 = vmatmul.mubr.f32.gmra.mrb[0].mxu0 %v1054
        %v1187 = vpop.f32.mrb[0].mxu0
        %v1188 = vadd.f32 0.0, %v1187
        %v1189 = vpop.f32.mrb[0].mxu0
        %1190 = vmatprep.mubr.f32.mxu0 0.0
        %1191 = vmatmul.mubr.f32.gmra.mrb[0].mxu0 %v1057
        %v1192 = vpop.f32.mrb[0].mxu0
        %v1193 = vadd.f32 0.0, %v1192
        %v1194 = vpop.f32.mrb[0].mxu0
        %1195 = vmatprep.mubr.f32.mxu0 0.0
        %1196 = vmatmul.mubr.f32.gmra.mrb[0].mxu0 %v1060
        %v1197 = vpop.f32.mrb[0].mxu0
        %v1198 = vadd.f32 0.0, %v1197
        %v1199 = vpop.f32.mrb[0].mxu0
        %1200 = vmatprep.mubr.f32.mxu0 0.0
        %1201 = vmatmul.mubr.f32.gmra.mrb[0].mxu0 %v1063
        %v1202 = vpop.f32.mrb[0].mxu0
        %v1203 = vadd.f32 0.0, %v1202
        %v1204 = vpop.f32.mrb[0].mxu0
        %1205 = vmatprep.mubr.f32.mxu0 0.0
        %1206 = vmatmul.mubr.f32.gmra.mrb[0].mxu0 %v1066
        %v1207 = vpop.f32.mrb[0].mxu0
        %v1208 = vadd.f32 0.0, %v1207
        %v1209 = vpop.f32.mrb[0].mxu0
        %1210 = vmatprep.mubr.f32.mxu0 0.0
        %1211 = vmatmul.mubr.f32.gmra.mrb[0].mxu0 %v1069
        %v1212 = vpop.f32.mrb[0].mxu0
        %v1213 = vadd.f32 0.0, %v1212
        %v1214 = vpop.f32.mrb[0].mxu0
        %1215 = vdwg.mxu0
        %v1216 = vadd.f32 %v937, %v1138
        %v1217 = vadd.f32 %v942, %v1143
        %v1218 = vadd.f32 %v947, %v1148
        %v1219 = vadd.f32 %v952, %v1153
        %v1220 = vadd.f32 %v957, %v1158
        %v1221 = vadd.f32 %v962, %v1163
        %v1222 = vadd.f32 %v967, %v1168
        %v1223 = vadd.f32 %v972, %v1173
        %v1224 = vadd.f32 %v977, %v1178
        %v1225 = vadd.f32 %v982, %v1183
        %v1226 = vadd.f32 %v987, %v1188
        %v1227 = vadd.f32 %v992, %v1193
        %v1228 = vadd.f32 %v997, %v1198
        %v1229 = vadd.f32 %v1002, %v1203
        %v1230 = vadd.f32 %v1007, %v1208
        %v1231 = vadd.f32 %v1012, %v1213
        %v1233 = vsel %vm821, %v756, 0
        %v1236 = vsel %vm821, %v757, 0
        %v1239 = vsel %vm821, %v758, 0
        %v1242 = vsel %vm821, %v759, 0
        %v1245 = vsel %vm821, %v760, 0
        %v1248 = vsel %vm821, %v761, 0
        %v1251 = vsel %vm821, %v762, 0
        %v1254 = vsel %vm821, %v763, 0
        %v1257 = vsel %vm821, %v764, 0
        %v1260 = vsel %vm821, %v765, 0
        %v1263 = vsel %vm821, %v766, 0
        %v1266 = vsel %vm821, %v767, 0
        %v1269 = vsel %vm821, %v768, 0
        %v1272 = vsel %vm821, %v769, 0
        %v1275 = vsel %vm821, %v770, 0
        %v1278 = vsel %vm821, %v771, 0
        %1280 = vmatprep.subr.mxu0 0.0
        %1281 = vmatpush1.msra.mxu0 %v1015
        %1282 = vmatprep.subr.mxu0 0.0
        %1283 = vmatpush1.msra.mxu0 %v1016
        %1284 = vmatprep.subr.mxu0 0.0
        %1285 = vmatpush1.msra.mxu0 %v1017
        %1286 = vmatprep.subr.mxu0 0.0
        %1287 = vmatpush1.msra.mxu0 %v1018
        %1288 = vmatprep.subr.mxu0 0.0
        %1289 = vmatpush1.msra.mxu0 %v1019
        %1290 = vmatprep.subr.mxu0 0.0
        %1291 = vmatpush1.msra.mxu0 %v1020
        %1292 = vmatprep.subr.mxu0 0.0
        %1293 = vmatpush1.msra.mxu0 %v1021
        %1294 = vmatprep.subr.mxu0 0.0
        %1295 = vmatpush1.msra.mxu0 %v1022
        %1296 = vmatprep.subr.mxu0 0.0
        %1297 = vmatpush1.msra.mxu0 0.0
        %1298 = vmatprep.subr.mxu0 0.0
        %1299 = vmatpush1.msra.mxu0 0.0
        %1300 = vmatprep.subr.mxu0 0.0
        %1301 = vmatpush1.msra.mxu0 0.0
        %1302 = vmatprep.subr.mxu0 0.0
        %1303 = vmatpush1.msra.mxu0 0.0
        %1304 = vmatprep.subr.mxu0 0.0
        %1305 = vmatpush1.msra.mxu0 0.0
        %1306 = vmatprep.subr.mxu0 0.0
        %1307 = vmatpush1.msra.mxu0 0.0
        %1308 = vmatprep.subr.mxu0 0.0
        %1309 = vmatpush1.msra.mxu0 0.0
        %1310 = vmatprep.subr.mxu0 0.0
        %1311 = vmatpush1.msra.mxu0 0.0
        %1312 = vmatprep.subr.mxu0 0.0
        %1313 = vmatpush1.msra.mxu0 0.0
        %1314 = vmatprep.subr.mxu0 0.0
        %1315 = vmatpush1.msra.mxu0 0.0
        %1316 = vmatprep.subr.mxu0 0.0
        %1317 = vmatpush1.msra.mxu0 0.0
        %1318 = vmatprep.subr.mxu0 0.0
        %1319 = vmatpush1.msra.mxu0 0.0
        %1320 = vmatprep.subr.mxu0 0.0
        %1321 = vmatpush1.msra.mxu0 0.0
        %1322 = vmatprep.subr.mxu0 0.0
        %1323 = vmatpush1.msra.mxu0 0.0
        %1324 = vmatprep.subr.mxu0 0.0
        %1325 = vmatpush1.msra.mxu0 0.0
        %1326 = vmatprep.subr.mxu0 0.0
        %1327 = vmatpush1.msra.mxu0 0.0
        %1328 = vmatprep.subr.mxu0 0.0
        %1329 = vmatpush1.msra.mxu0 0.0
        %1330 = vmatprep.subr.mxu0 0.0
        %1331 = vmatpush1.msra.mxu0 0.0
        %1332 = vmatprep.subr.mxu0 0.0
        %1333 = vmatpush1.msra.mxu0 0.0
        %1334 = vmatprep.subr.mxu0 0.0
        %1335 = vmatpush1.msra.mxu0 0.0
        %1336 = vmatprep.subr.mxu0 0.0
        %1337 = vmatpush1.msra.mxu0 0.0
        %1338 = vmatprep.subr.mxu0 0.0
        %1339 = vmatpush1.msra.mxu0 0.0
        %1340 = vmatprep.subr.mxu0 0.0
        %1341 = vmatpush1.msra.mxu0 0.0
        %1342 = vmatprep.subr.mxu0 0.0
        %1343 = vmatpush1.msra.mxu0 0.0
        %1344 = vmatprep.mubr.f32.mxu0 0.0
        %1345 = vmatmul.mubr.f32.gmra.mrb[0].mxu0 %v1233
        %v1346 = vpop.f32.mrb[0].mxu0
        %v1347 = vadd.f32 0.0, %v1346
        %v1348 = vpop.f32.mrb[0].mxu0
        %1349 = vmatprep.mubr.f32.mxu0 0.0
        %1350 = vmatmul.mubr.f32.gmra.mrb[0].mxu0 %v1236
        %v1351 = vpop.f32.mrb[0].mxu0
        %v1352 = vadd.f32 0.0, %v1351
        %v1353 = vpop.f32.mrb[0].mxu0
        %1354 = vmatprep.mubr.f32.mxu0 0.0
        %1355 = vmatmul.mubr.f32.gmra.mrb[0].mxu0 %v1239
        %v1356 = vpop.f32.mrb[0].mxu0
        %v1357 = vadd.f32 0.0, %v1356
        %v1358 = vpop.f32.mrb[0].mxu0
        %1359 = vmatprep.mubr.f32.mxu0 0.0
        %1360 = vmatmul.mubr.f32.gmra.mrb[0].mxu0 %v1242
        %v1361 = vpop.f32.mrb[0].mxu0
        %v1362 = vadd.f32 0.0, %v1361
        %v1363 = vpop.f32.mrb[0].mxu0
        %1364 = vmatprep.mubr.f32.mxu0 0.0
        %1365 = vmatmul.mubr.f32.gmra.mrb[0].mxu0 %v1245
        %v1366 = vpop.f32.mrb[0].mxu0
        %v1367 = vadd.f32 0.0, %v1366
        %v1368 = vpop.f32.mrb[0].mxu0
        %1369 = vmatprep.mubr.f32.mxu0 0.0
        %1370 = vmatmul.mubr.f32.gmra.mrb[0].mxu0 %v1248
        %v1371 = vpop.f32.mrb[0].mxu0
        %v1372 = vadd.f32 0.0, %v1371
        %v1373 = vpop.f32.mrb[0].mxu0
        %1374 = vmatprep.mubr.f32.mxu0 0.0
        %1375 = vmatmul.mubr.f32.gmra.mrb[0].mxu0 %v1251
        %v1376 = vpop.f32.mrb[0].mxu0
        %v1377 = vadd.f32 0.0, %v1376
        %v1378 = vpop.f32.mrb[0].mxu0
        %1379 = vmatprep.mubr.f32.mxu0 0.0
        %1380 = vmatmul.mubr.f32.gmra.mrb[0].mxu0 %v1254
        %v1381 = vpop.f32.mrb[0].mxu0
        %v1382 = vadd.f32 0.0, %v1381
        %v1383 = vpop.f32.mrb[0].mxu0
        %1384 = vmatprep.mubr.f32.mxu0 0.0
        %1385 = vmatmul.mubr.f32.gmra.mrb[0].mxu0 %v1257
        %v1386 = vpop.f32.mrb[0].mxu0
        %v1387 = vadd.f32 0.0, %v1386
        %v1388 = vpop.f32.mrb[0].mxu0
        %1389 = vmatprep.mubr.f32.mxu0 0.0
        %1390 = vmatmul.mubr.f32.gmra.mrb[0].mxu0 %v1260
        %v1391 = vpop.f32.mrb[0].mxu0
        %v1392 = vadd.f32 0.0, %v1391
        %v1393 = vpop.f32.mrb[0].mxu0
        %1394 = vmatprep.mubr.f32.mxu0 0.0
        %1395 = vmatmul.mubr.f32.gmra.mrb[0].mxu0 %v1263
        %v1396 = vpop.f32.mrb[0].mxu0
        %v1397 = vadd.f32 0.0, %v1396
        %v1398 = vpop.f32.mrb[0].mxu0
        %1399 = vmatprep.mubr.f32.mxu0 0.0
        %1400 = vmatmul.mubr.f32.gmra.mrb[0].mxu0 %v1266
        %v1401 = vpop.f32.mrb[0].mxu0
        %v1402 = vadd.f32 0.0, %v1401
        %v1403 = vpop.f32.mrb[0].mxu0
        %1404 = vmatprep.mubr.f32.mxu0 0.0
        %1405 = vmatmul.mubr.f32.gmra.mrb[0].mxu0 %v1269
        %v1406 = vpop.f32.mrb[0].mxu0
        %v1407 = vadd.f32 0.0, %v1406
        %v1408 = vpop.f32.mrb[0].mxu0
        %1409 = vmatprep.mubr.f32.mxu0 0.0
        %1410 = vmatmul.mubr.f32.gmra.mrb[0].mxu0 %v1272
        %v1411 = vpop.f32.mrb[0].mxu0
        %v1412 = vadd.f32 0.0, %v1411
        %v1413 = vpop.f32.mrb[0].mxu0
        %1414 = vmatprep.mubr.f32.mxu0 0.0
        %1415 = vmatmul.mubr.f32.gmra.mrb[0].mxu0 %v1275
        %v1416 = vpop.f32.mrb[0].mxu0
        %v1417 = vadd.f32 0.0, %v1416
        %v1418 = vpop.f32.mrb[0].mxu0
        %1419 = vmatprep.mubr.f32.mxu0 0.0
        %1420 = vmatmul.mubr.f32.gmra.mrb[0].mxu0 %v1278
        %v1421 = vpop.f32.mrb[0].mxu0
        %v1422 = vadd.f32 0.0, %v1421
        %v1423 = vpop.f32.mrb[0].mxu0
        %1424 = vdwg.mxu0
        %v1425 = vadd.f32 %v937, %v1347
        %v1426 = vadd.f32 %v942, %v1352
        %v1427 = vadd.f32 %v947, %v1357
        %v1428 = vadd.f32 %v952, %v1362
        %v1429 = vadd.f32 %v957, %v1367
        %v1430 = vadd.f32 %v962, %v1372
        %v1431 = vadd.f32 %v967, %v1377
        %v1432 = vadd.f32 %v972, %v1382
        %v1433 = vadd.f32 %v977, %v1387
        %v1434 = vadd.f32 %v982, %v1392
        %v1435 = vadd.f32 %v987, %v1397
        %v1436 = vadd.f32 %v992, %v1402
        %v1437 = vadd.f32 %v997, %v1407
        %v1438 = vadd.f32 %v1002, %v1412
        %v1439 = vadd.f32 %v1007, %v1417
        %v1440 = vadd.f32 %v1012, %v1422
        %v1442 = vsel %vm821, %v773, 0
        %v1445 = vsel %vm821, %v774, 0
        %v1448 = vsel %vm821, %v775, 0
        %v1451 = vsel %vm821, %v776, 0
        %v1454 = vsel %vm821, %v777, 0
        %v1457 = vsel %vm821, %v778, 0
        %v1460 = vsel %vm821, %v779, 0
        %v1463 = vsel %vm821, %v780, 0
        %v1466 = vsel %vm821, %v781, 0
        %v1469 = vsel %vm821, %v782, 0
        %v1472 = vsel %vm821, %v783, 0
        %v1475 = vsel %vm821, %v784, 0
        %v1478 = vsel %vm821, %v785, 0
        %v1481 = vsel %vm821, %v786, 0
        %v1484 = vsel %vm821, %v787, 0
        %v1487 = vsel %vm821, %v788, 0
        %1489 = vmatprep.subr.mxu0 0.0
        %1490 = vmatpush1.msra.mxu0 %v1015
        %1491 = vmatprep.subr.mxu0 0.0
        %1492 = vmatpush1.msra.mxu0 %v1016
        %1493 = vmatprep.subr.mxu0 0.0
        %1494 = vmatpush1.msra.mxu0 %v1017
        %1495 = vmatprep.subr.mxu0 0.0
        %1496 = vmatpush1.msra.mxu0 %v1018
        %1497 = vmatprep.subr.mxu0 0.0
        %1498 = vmatpush1.msra.mxu0 %v1019
        %1499 = vmatprep.subr.mxu0 0.0
        %1500 = vmatpush1.msra.mxu0 %v1020
        %1501 = vmatprep.subr.mxu0 0.0
        %1502 = vmatpush1.msra.mxu0 %v1021
        %1503 = vmatprep.subr.mxu0 0.0
        %1504 = vmatpush1.msra.mxu0 %v1022
        %1505 = vmatprep.subr.mxu0 0.0
        %1506 = vmatpush1.msra.mxu0 0.0
        %1507 = vmatprep.subr.mxu0 0.0
        %1508 = vmatpush1.msra.mxu0 0.0
        %1509 = vmatprep.subr.mxu0 0.0
        %1510 = vmatpush1.msra.mxu0 0.0
        %1511 = vmatprep.subr.mxu0 0.0
        %1512 = vmatpush1.msra.mxu0 0.0
        %1513 = vmatprep.subr.mxu0 0.0
        %1514 = vmatpush1.msra.mxu0 0.0
        %1515 = vmatprep.subr.mxu0 0.0
        %1516 = vmatpush1.msra.mxu0 0.0
        %1517 = vmatprep.subr.mxu0 0.0
        %1518 = vmatpush1.msra.mxu0 0.0
        %1519 = vmatprep.subr.mxu0 0.0
        %1520 = vmatpush1.msra.mxu0 0.0
        %1521 = vmatprep.subr.mxu0 0.0
        %1522 = vmatpush1.msra.mxu0 0.0
        %1523 = vmatprep.subr.mxu0 0.0
        %1524 = vmatpush1.msra.mxu0 0.0
        %1525 = vmatprep.subr.mxu0 0.0
        %1526 = vmatpush1.msra.mxu0 0.0
        %1527 = vmatprep.subr.mxu0 0.0
        %1528 = vmatpush1.msra.mxu0 0.0
        %1529 = vmatprep.subr.mxu0 0.0
        %1530 = vmatpush1.msra.mxu0 0.0
        %1531 = vmatprep.subr.mxu0 0.0
        %1532 = vmatpush1.msra.mxu0 0.0
        %1533 = vmatprep.subr.mxu0 0.0
        %1534 = vmatpush1.msra.mxu0 0.0
        %1535 = vmatprep.subr.mxu0 0.0
        %1536 = vmatpush1.msra.mxu0 0.0
        %1537 = vmatprep.subr.mxu0 0.0
        %1538 = vmatpush1.msra.mxu0 0.0
        %1539 = vmatprep.subr.mxu0 0.0
        %1540 = vmatpush1.msra.mxu0 0.0
        %1541 = vmatprep.subr.mxu0 0.0
        %1542 = vmatpush1.msra.mxu0 0.0
        %1543 = vmatprep.subr.mxu0 0.0
        %1544 = vmatpush1.msra.mxu0 0.0
        %1545 = vmatprep.subr.mxu0 0.0
        %1546 = vmatpush1.msra.mxu0 0.0
        %1547 = vmatprep.subr.mxu0 0.0
        %1548 = vmatpush1.msra.mxu0 0.0
        %1549 = vmatprep.subr.mxu0 0.0
        %1550 = vmatpush1.msra.mxu0 0.0
        %1551 = vmatprep.subr.mxu0 0.0
        %1552 = vmatpush1.msra.mxu0 0.0
        %1553 = vmatprep.mubr.f32.mxu0 0.0
        %1554 = vmatmul.mubr.f32.gmra.mrb[0].mxu0 %v1442
        %v1555 = vpop.f32.mrb[0].mxu0
        %v1556 = vadd.f32 0.0, %v1555
        %v1557 = vpop.f32.mrb[0].mxu0
        %1558 = vmatprep.mubr.f32.mxu0 0.0
        %1559 = vmatmul.mubr.f32.gmra.mrb[0].mxu0 %v1445
        %v1560 = vpop.f32.mrb[0].mxu0
        %v1561 = vadd.f32 0.0, %v1560
        %v1562 = vpop.f32.mrb[0].mxu0
        %1563 = vmatprep.mubr.f32.mxu0 0.0
        %1564 = vmatmul.mubr.f32.gmra.mrb[0].mxu0 %v1448
        %v1565 = vpop.f32.mrb[0].mxu0
        %v1566 = vadd.f32 0.0, %v1565
        %v1567 = vpop.f32.mrb[0].mxu0
        %1568 = vmatprep.mubr.f32.mxu0 0.0
        %1569 = vmatmul.mubr.f32.gmra.mrb[0].mxu0 %v1451
        %v1570 = vpop.f32.mrb[0].mxu0
        %v1571 = vadd.f32 0.0, %v1570
        %v1572 = vpop.f32.mrb[0].mxu0
        %1573 = vmatprep.mubr.f32.mxu0 0.0
        %1574 = vmatmul.mubr.f32.gmra.mrb[0].mxu0 %v1454
        %v1575 = vpop.f32.mrb[0].mxu0
        %v1576 = vadd.f32 0.0, %v1575
        %v1577 = vpop.f32.mrb[0].mxu0
        %1578 = vmatprep.mubr.f32.mxu0 0.0
        %1579 = vmatmul.mubr.f32.gmra.mrb[0].mxu0 %v1457
        %v1580 = vpop.f32.mrb[0].mxu0
        %v1581 = vadd.f32 0.0, %v1580
        %v1582 = vpop.f32.mrb[0].mxu0
        %1583 = vmatprep.mubr.f32.mxu0 0.0
        %1584 = vmatmul.mubr.f32.gmra.mrb[0].mxu0 %v1460
        %v1585 = vpop.f32.mrb[0].mxu0
        %v1586 = vadd.f32 0.0, %v1585
        %v1587 = vpop.f32.mrb[0].mxu0
        %1588 = vmatprep.mubr.f32.mxu0 0.0
        %1589 = vmatmul.mubr.f32.gmra.mrb[0].mxu0 %v1463
        %v1590 = vpop.f32.mrb[0].mxu0
        %v1591 = vadd.f32 0.0, %v1590
        %v1592 = vpop.f32.mrb[0].mxu0
        %1593 = vmatprep.mubr.f32.mxu0 0.0
        %1594 = vmatmul.mubr.f32.gmra.mrb[0].mxu0 %v1466
        %v1595 = vpop.f32.mrb[0].mxu0
        %v1596 = vadd.f32 0.0, %v1595
        %v1597 = vpop.f32.mrb[0].mxu0
        %1598 = vmatprep.mubr.f32.mxu0 0.0
        %1599 = vmatmul.mubr.f32.gmra.mrb[0].mxu0 %v1469
        %v1600 = vpop.f32.mrb[0].mxu0
        %v1601 = vadd.f32 0.0, %v1600
        %v1602 = vpop.f32.mrb[0].mxu0
        %1603 = vmatprep.mubr.f32.mxu0 0.0
        %1604 = vmatmul.mubr.f32.gmra.mrb[0].mxu0 %v1472
        %v1605 = vpop.f32.mrb[0].mxu0
        %v1606 = vadd.f32 0.0, %v1605
        %v1607 = vpop.f32.mrb[0].mxu0
        %1608 = vmatprep.mubr.f32.mxu0 0.0
        %1609 = vmatmul.mubr.f32.gmra.mrb[0].mxu0 %v1475
        %v1610 = vpop.f32.mrb[0].mxu0
        %v1611 = vadd.f32 0.0, %v1610
        %v1612 = vpop.f32.mrb[0].mxu0
        %1613 = vmatprep.mubr.f32.mxu0 0.0
        %1614 = vmatmul.mubr.f32.gmra.mrb[0].mxu0 %v1478
        %v1615 = vpop.f32.mrb[0].mxu0
        %v1616 = vadd.f32 0.0, %v1615
        %v1617 = vpop.f32.mrb[0].mxu0
        %1618 = vmatprep.mubr.f32.mxu0 0.0
        %1619 = vmatmul.mubr.f32.gmra.mrb[0].mxu0 %v1481
        %v1620 = vpop.f32.mrb[0].mxu0
        %v1621 = vadd.f32 0.0, %v1620
        %v1622 = vpop.f32.mrb[0].mxu0
        %1623 = vmatprep.mubr.f32.mxu0 0.0
        %1624 = vmatmul.mubr.f32.gmra.mrb[0].mxu0 %v1484
        %v1625 = vpop.f32.mrb[0].mxu0
        %v1626 = vadd.f32 0.0, %v1625
        %v1627 = vpop.f32.mrb[0].mxu0
        %1628 = vmatprep.mubr.f32.mxu0 0.0
        %1629 = vmatmul.mubr.f32.gmra.mrb[0].mxu0 %v1487
        %v1630 = vpop.f32.mrb[0].mxu0
        %v1631 = vadd.f32 0.0, %v1630
        %v1632 = vpop.f32.mrb[0].mxu0
        %1633 = vdwg.mxu0
        %v1634 = vadd.f32 %v937, %v1556
        %v1635 = vadd.f32 %v942, %v1561
        %v1636 = vadd.f32 %v947, %v1566
        %v1637 = vadd.f32 %v952, %v1571
        %v1638 = vadd.f32 %v957, %v1576
        %v1639 = vadd.f32 %v962, %v1581
        %v1640 = vadd.f32 %v967, %v1586
        %v1641 = vadd.f32 %v972, %v1591
        %v1642 = vadd.f32 %v977, %v1596
        %v1643 = vadd.f32 %v982, %v1601
        %v1644 = vadd.f32 %v987, %v1606
        %v1645 = vadd.f32 %v992, %v1611
        %v1646 = vadd.f32 %v997, %v1616
        %v1647 = vadd.f32 %v1002, %v1621
        %v1648 = vadd.f32 %v1007, %v1626
        %v1649 = vadd.f32 %v1012, %v1631
        %v1651 = vsel %vm821, %v790, 0
        %v1654 = vsel %vm821, %v791, 0
        %v1657 = vsel %vm821, %v792, 0
        %v1660 = vsel %vm821, %v793, 0
        %v1663 = vsel %vm821, %v794, 0
        %v1666 = vsel %vm821, %v795, 0
        %v1669 = vsel %vm821, %v796, 0
        %v1672 = vsel %vm821, %v797, 0
        %v1675 = vsel %vm821, %v798, 0
        %v1678 = vsel %vm821, %v799, 0
        %v1681 = vsel %vm821, %v800, 0
        %v1684 = vsel %vm821, %v801, 0
        %v1687 = vsel %vm821, %v802, 0
        %v1690 = vsel %vm821, %v803, 0
        %v1693 = vsel %vm821, %v804, 0
        %v1696 = vsel %vm821, %v805, 0
        %1698 = vmatprep.subr.mxu0 0.0
        %1699 = vmatpush1.msra.mxu0 %v1015
        %1700 = vmatprep.subr.mxu0 0.0
        %1701 = vmatpush1.msra.mxu0 %v1016
        %1702 = vmatprep.subr.mxu0 0.0
        %1703 = vmatpush1.msra.mxu0 %v1017
        %1704 = vmatprep.subr.mxu0 0.0
        %1705 = vmatpush1.msra.mxu0 %v1018
        %1706 = vmatprep.subr.mxu0 0.0
        %1707 = vmatpush1.msra.mxu0 %v1019
        %1708 = vmatprep.subr.mxu0 0.0
        %1709 = vmatpush1.msra.mxu0 %v1020
        %1710 = vmatprep.subr.mxu0 0.0
        %1711 = vmatpush1.msra.mxu0 %v1021
        %1712 = vmatprep.subr.mxu0 0.0
        %1713 = vmatpush1.msra.mxu0 %v1022
        %1714 = vmatprep.subr.mxu0 0.0
        %1715 = vmatpush1.msra.mxu0 0.0
        %1716 = vmatprep.subr.mxu0 0.0
        %1717 = vmatpush1.msra.mxu0 0.0
        %1718 = vmatprep.subr.mxu0 0.0
        %1719 = vmatpush1.msra.mxu0 0.0
        %1720 = vmatprep.subr.mxu0 0.0
        %1721 = vmatpush1.msra.mxu0 0.0
        %1722 = vmatprep.subr.mxu0 0.0
        %1723 = vmatpush1.msra.mxu0 0.0
        %1724 = vmatprep.subr.mxu0 0.0
        %1725 = vmatpush1.msra.mxu0 0.0
        %1726 = vmatprep.subr.mxu0 0.0
        %1727 = vmatpush1.msra.mxu0 0.0
        %1728 = vmatprep.subr.mxu0 0.0
        %1729 = vmatpush1.msra.mxu0 0.0
        %1730 = vmatprep.subr.mxu0 0.0
        %1731 = vmatpush1.msra.mxu0 0.0
        %1732 = vmatprep.subr.mxu0 0.0
        %1733 = vmatpush1.msra.mxu0 0.0
        %1734 = vmatprep.subr.mxu0 0.0
        %1735 = vmatpush1.msra.mxu0 0.0
        %1736 = vmatprep.subr.mxu0 0.0
        %1737 = vmatpush1.msra.mxu0 0.0
        %1738 = vmatprep.subr.mxu0 0.0
        %1739 = vmatpush1.msra.mxu0 0.0
        %1740 = vmatprep.subr.mxu0 0.0
        %1741 = vmatpush1.msra.mxu0 0.0
        %1742 = vmatprep.subr.mxu0 0.0
        %1743 = vmatpush1.msra.mxu0 0.0
        %1744 = vmatprep.subr.mxu0 0.0
        %1745 = vmatpush1.msra.mxu0 0.0
        %1746 = vmatprep.subr.mxu0 0.0
        %1747 = vmatpush1.msra.mxu0 0.0
        %1748 = vmatprep.subr.mxu0 0.0
        %1749 = vmatpush1.msra.mxu0 0.0
        %1750 = vmatprep.subr.mxu0 0.0
        %1751 = vmatpush1.msra.mxu0 0.0
        %1752 = vmatprep.subr.mxu0 0.0
        %1753 = vmatpush1.msra.mxu0 0.0
        %1754 = vmatprep.subr.mxu0 0.0
        %1755 = vmatpush1.msra.mxu0 0.0
        %1756 = vmatprep.subr.mxu0 0.0
        %1757 = vmatpush1.msra.mxu0 0.0
        %1758 = vmatprep.subr.mxu0 0.0
        %1759 = vmatpush1.msra.mxu0 0.0
        %1760 = vmatprep.subr.mxu0 0.0
        %1761 = vmatpush1.msra.mxu0 0.0
        %1762 = vmatprep.mubr.f32.mxu0 0.0
        %1763 = vmatmul.mubr.f32.gmra.mrb[0].mxu0 %v1651
        %v1764 = vpop.f32.mrb[0].mxu0
        %v1765 = vadd.f32 0.0, %v1764
        %v1766 = vpop.f32.mrb[0].mxu0
        %1767 = vmatprep.mubr.f32.mxu0 0.0
        %1768 = vmatmul.mubr.f32.gmra.mrb[0].mxu0 %v1654
        %v1769 = vpop.f32.mrb[0].mxu0
        %v1770 = vadd.f32 0.0, %v1769
        %v1771 = vpop.f32.mrb[0].mxu0
        %1772 = vmatprep.mubr.f32.mxu0 0.0
        %1773 = vmatmul.mubr.f32.gmra.mrb[0].mxu0 %v1657
        %v1774 = vpop.f32.mrb[0].mxu0
        %v1775 = vadd.f32 0.0, %v1774
        %v1776 = vpop.f32.mrb[0].mxu0
        %1777 = vmatprep.mubr.f32.mxu0 0.0
        %1778 = vmatmul.mubr.f32.gmra.mrb[0].mxu0 %v1660
        %v1779 = vpop.f32.mrb[0].mxu0
        %v1780 = vadd.f32 0.0, %v1779
        %v1781 = vpop.f32.mrb[0].mxu0
        %1782 = vmatprep.mubr.f32.mxu0 0.0
        %1783 = vmatmul.mubr.f32.gmra.mrb[0].mxu0 %v1663
        %v1784 = vpop.f32.mrb[0].mxu0
        %v1785 = vadd.f32 0.0, %v1784
        %v1786 = vpop.f32.mrb[0].mxu0
        %1787 = vmatprep.mubr.f32.mxu0 0.0
        %1788 = vmatmul.mubr.f32.gmra.mrb[0].mxu0 %v1666
        %v1789 = vpop.f32.mrb[0].mxu0
        %v1790 = vadd.f32 0.0, %v1789
        %v1791 = vpop.f32.mrb[0].mxu0
        %1792 = vmatprep.mubr.f32.mxu0 0.0
        %1793 = vmatmul.mubr.f32.gmra.mrb[0].mxu0 %v1669
        %v1794 = vpop.f32.mrb[0].mxu0
        %v1795 = vadd.f32 0.0, %v1794
        %v1796 = vpop.f32.mrb[0].mxu0
        %1797 = vmatprep.mubr.f32.mxu0 0.0
        %1798 = vmatmul.mubr.f32.gmra.mrb[0].mxu0 %v1672
        %v1799 = vpop.f32.mrb[0].mxu0
        %v1800 = vadd.f32 0.0, %v1799
        %v1801 = vpop.f32.mrb[0].mxu0
        %1802 = vmatprep.mubr.f32.mxu0 0.0
        %1803 = vmatmul.mubr.f32.gmra.mrb[0].mxu0 %v1675
        %v1804 = vpop.f32.mrb[0].mxu0
        %v1805 = vadd.f32 0.0, %v1804
        %v1806 = vpop.f32.mrb[0].mxu0
        %1807 = vmatprep.mubr.f32.mxu0 0.0
        %1808 = vmatmul.mubr.f32.gmra.mrb[0].mxu0 %v1678
        %v1809 = vpop.f32.mrb[0].mxu0
        %v1810 = vadd.f32 0.0, %v1809
        %v1811 = vpop.f32.mrb[0].mxu0
        %1812 = vmatprep.mubr.f32.mxu0 0.0
        %1813 = vmatmul.mubr.f32.gmra.mrb[0].mxu0 %v1681
        %v1814 = vpop.f32.mrb[0].mxu0
        %v1815 = vadd.f32 0.0, %v1814
        %v1816 = vpop.f32.mrb[0].mxu0
        %1817 = vmatprep.mubr.f32.mxu0 0.0
        %1818 = vmatmul.mubr.f32.gmra.mrb[0].mxu0 %v1684
        %v1819 = vpop.f32.mrb[0].mxu0
        %v1820 = vadd.f32 0.0, %v1819
        %v1821 = vpop.f32.mrb[0].mxu0
        %1822 = vmatprep.mubr.f32.mxu0 0.0
        %1823 = vmatmul.mubr.f32.gmra.mrb[0].mxu0 %v1687
        %v1824 = vpop.f32.mrb[0].mxu0
        %v1825 = vadd.f32 0.0, %v1824
        %v1826 = vpop.f32.mrb[0].mxu0
        %1827 = vmatprep.mubr.f32.mxu0 0.0
        %1828 = vmatmul.mubr.f32.gmra.mrb[0].mxu0 %v1690
        %v1829 = vpop.f32.mrb[0].mxu0
        %v1830 = vadd.f32 0.0, %v1829
        %v1831 = vpop.f32.mrb[0].mxu0
        %1832 = vmatprep.mubr.f32.mxu0 0.0
        %1833 = vmatmul.mubr.f32.gmra.mrb[0].mxu0 %v1693
        %v1834 = vpop.f32.mrb[0].mxu0
        %v1835 = vadd.f32 0.0, %v1834
        %v1836 = vpop.f32.mrb[0].mxu0
        %1837 = vmatprep.mubr.f32.mxu0 0.0
        %1838 = vmatmul.mubr.f32.gmra.mrb[0].mxu0 %v1696
        %v1839 = vpop.f32.mrb[0].mxu0
        %v1840 = vadd.f32 0.0, %v1839
        %v1841 = vpop.f32.mrb[0].mxu0
        %1842 = vdwg.mxu0
        %v1843 = vadd.f32 %v937, %v1765
        %v1844 = vadd.f32 %v942, %v1770
        %v1845 = vadd.f32 %v947, %v1775
        %v1846 = vadd.f32 %v952, %v1780
        %v1847 = vadd.f32 %v957, %v1785
        %v1848 = vadd.f32 %v962, %v1790
        %v1849 = vadd.f32 %v967, %v1795
        %v1850 = vadd.f32 %v972, %v1800
        %v1851 = vadd.f32 %v977, %v1805
        %v1852 = vadd.f32 %v982, %v1810
        %v1853 = vadd.f32 %v987, %v1815
        %v1854 = vadd.f32 %v992, %v1820
        %v1855 = vadd.f32 %v997, %v1825
        %v1856 = vadd.f32 %v1002, %v1830
        %v1857 = vadd.f32 %v1007, %v1835
        %v1858 = vadd.f32 %v1012, %v1840
        %v1859 = vld [vmem:[%s5] sm:$0xff]
        %v1860 = vld [vmem:[%s5 + $0x8] sm:$0xff]
        %v1861 = vld [vmem:[%s5 + $0x10] sm:$0xff]
        %v1862 = vld [vmem:[%s5 + $0x18] sm:$0xff]
        %v1863 = vld [vmem:[%s5 + $0x20] sm:$0xff]
        %v1864 = vld [vmem:[%s5 + $0x28] sm:$0xff]
        %v1865 = vld [vmem:[%s5 + $0x30] sm:$0xff]
        %v1866 = vld [vmem:[%s5 + $0x38] sm:$0xff]
        %v1867 = vld [vmem:[%s6] sm:$0xff]
        %v1868 = vld [vmem:[%s6 + $0x8] sm:$0xff]
        %v1869 = vld [vmem:[%s6 + $0x10] sm:$0xff]
        %v1870 = vld [vmem:[%s6 + $0x18] sm:$0xff]
        %v1871 = vld [vmem:[%s6 + $0x20] sm:$0xff]
        %v1872 = vld [vmem:[%s6 + $0x28] sm:$0xff]
        %v1873 = vld [vmem:[%s6 + $0x30] sm:$0xff]
        %v1874 = vld [vmem:[%s6 + $0x38] sm:$0xff]
        %1875 = vmatprep.subr.mxu0 0.0
        %1876 = vmatpush1.msra.mxu0 %v1867
        %1877 = vmatprep.subr.mxu0 0.0
        %1878 = vmatpush1.msra.mxu0 %v1868
        %1879 = vmatprep.subr.mxu0 0.0
        %1880 = vmatpush1.msra.mxu0 %v1869
        %1881 = vmatprep.subr.mxu0 0.0
        %1882 = vmatpush1.msra.mxu0 %v1870
        %1883 = vmatprep.subr.mxu0 0.0
        %1884 = vmatpush1.msra.mxu0 %v1871
        %1885 = vmatprep.subr.mxu0 0.0
        %1886 = vmatpush1.msra.mxu0 %v1872
        %1887 = vmatprep.subr.mxu0 0.0
        %1888 = vmatpush1.msra.mxu0 %v1873
        %1889 = vmatprep.subr.mxu0 0.0
        %1890 = vmatpush1.msra.mxu0 %v1874
        %1891 = vmatprep.subr.mxu0 0.0
        %1892 = vmatpush1.msra.mxu0 0.0
        %1893 = vmatprep.subr.mxu0 0.0
        %1894 = vmatpush1.msra.mxu0 0.0
        %1895 = vmatprep.subr.mxu0 0.0
        %1896 = vmatpush1.msra.mxu0 0.0
        %1897 = vmatprep.subr.mxu0 0.0
        %1898 = vmatpush1.msra.mxu0 0.0
        %1899 = vmatprep.subr.mxu0 0.0
        %1900 = vmatpush1.msra.mxu0 0.0
        %1901 = vmatprep.subr.mxu0 0.0
        %1902 = vmatpush1.msra.mxu0 0.0
        %1903 = vmatprep.subr.mxu0 0.0
        %1904 = vmatpush1.msra.mxu0 0.0
        %1905 = vmatprep.subr.mxu0 0.0
        %1906 = vmatpush1.msra.mxu0 0.0
        %1907 = vmatprep.subr.mxu0 0.0
        %1908 = vmatpush1.msra.mxu0 0.0
        %1909 = vmatprep.subr.mxu0 0.0
        %1910 = vmatpush1.msra.mxu0 0.0
        %1911 = vmatprep.subr.mxu0 0.0
        %1912 = vmatpush1.msra.mxu0 0.0
        %1913 = vmatprep.subr.mxu0 0.0
        %1914 = vmatpush1.msra.mxu0 0.0
        %1915 = vmatprep.subr.mxu0 0.0
        %1916 = vmatpush1.msra.mxu0 0.0
        %1917 = vmatprep.subr.mxu0 0.0
        %1918 = vmatpush1.msra.mxu0 0.0
        %1919 = vmatprep.subr.mxu0 0.0
        %1920 = vmatpush1.msra.mxu0 0.0
        %1921 = vmatprep.subr.mxu0 0.0
        %1922 = vmatpush1.msra.mxu0 0.0
        %1923 = vmatprep.subr.mxu0 0.0
        %1924 = vmatpush1.msra.mxu0 0.0
        %1925 = vmatprep.subr.mxu0 0.0
        %1926 = vmatpush1.msra.mxu0 0.0
        %1927 = vmatprep.subr.mxu0 0.0
        %1928 = vmatpush1.msra.mxu0 0.0
        %1929 = vmatprep.subr.mxu0 0.0
        %1930 = vmatpush1.msra.mxu0 0.0
        %1931 = vmatprep.subr.mxu0 0.0
        %1932 = vmatpush1.msra.mxu0 0.0
        %1933 = vmatprep.subr.mxu0 0.0
        %1934 = vmatpush1.msra.mxu0 0.0
        %1935 = vmatprep.subr.mxu0 0.0
        %1936 = vmatpush1.msra.mxu0 0.0
        %1937 = vmatprep.subr.mxu0 0.0
        %1938 = vmatpush1.msra.mxu0 0.0
        %1939 = vmatprep.mubr.f32.mxu0 0.0
        %1940 = vmatmul.mubr.f32.gmra.mrb[0].mxu0 %v1024
        %v1941 = vpop.f32.mrb[0].mxu0
        %v1942 = vadd.f32 0.0, %v1941
        %v1943 = vpop.f32.mrb[0].mxu0
        %1944 = vmatprep.mubr.f32.mxu0 0.0
        %1945 = vmatmul.mubr.f32.gmra.mrb[0].mxu0 %v1027
        %v1946 = vpop.f32.mrb[0].mxu0
        %v1947 = vadd.f32 0.0, %v1946
        %v1948 = vpop.f32.mrb[0].mxu0
        %1949 = vmatprep.mubr.f32.mxu0 0.0
        %1950 = vmatmul.mubr.f32.gmra.mrb[0].mxu0 %v1030
        %v1951 = vpop.f32.mrb[0].mxu0
        %v1952 = vadd.f32 0.0, %v1951
        %v1953 = vpop.f32.mrb[0].mxu0
        %1954 = vmatprep.mubr.f32.mxu0 0.0
        %1955 = vmatmul.mubr.f32.gmra.mrb[0].mxu0 %v1033
        %v1956 = vpop.f32.mrb[0].mxu0
        %v1957 = vadd.f32 0.0, %v1956
        %v1958 = vpop.f32.mrb[0].mxu0
        %1959 = vmatprep.mubr.f32.mxu0 0.0
        %1960 = vmatmul.mubr.f32.gmra.mrb[0].mxu0 %v1036
        %v1961 = vpop.f32.mrb[0].mxu0
        %v1962 = vadd.f32 0.0, %v1961
        %v1963 = vpop.f32.mrb[0].mxu0
        %1964 = vmatprep.mubr.f32.mxu0 0.0
        %1965 = vmatmul.mubr.f32.gmra.mrb[0].mxu0 %v1039
        %v1966 = vpop.f32.mrb[0].mxu0
        %v1967 = vadd.f32 0.0, %v1966
        %v1968 = vpop.f32.mrb[0].mxu0
        %1969 = vmatprep.mubr.f32.mxu0 0.0
        %1970 = vmatmul.mubr.f32.gmra.mrb[0].mxu0 %v1042
        %v1971 = vpop.f32.mrb[0].mxu0
        %v1972 = vadd.f32 0.0, %v1971
        %v1973 = vpop.f32.mrb[0].mxu0
        %1974 = vmatprep.mubr.f32.mxu0 0.0
        %1975 = vmatmul.mubr.f32.gmra.mrb[0].mxu0 %v1045
        %v1976 = vpop.f32.mrb[0].mxu0
        %v1977 = vadd.f32 0.0, %v1976
        %v1978 = vpop.f32.mrb[0].mxu0
        %1979 = vmatprep.mubr.f32.mxu0 0.0
        %1980 = vmatmul.mubr.f32.gmra.mrb[0].mxu0 %v1048
        %v1981 = vpop.f32.mrb[0].mxu0
        %v1982 = vadd.f32 0.0, %v1981
        %v1983 = vpop.f32.mrb[0].mxu0
        %1984 = vmatprep.mubr.f32.mxu0 0.0
        %1985 = vmatmul.mubr.f32.gmra.mrb[0].mxu0 %v1051
        %v1986 = vpop.f32.mrb[0].mxu0
        %v1987 = vadd.f32 0.0, %v1986
        %v1988 = vpop.f32.mrb[0].mxu0
        %1989 = vmatprep.mubr.f32.mxu0 0.0
        %1990 = vmatmul.mubr.f32.gmra.mrb[0].mxu0 %v1054
        %v1991 = vpop.f32.mrb[0].mxu0
        %v1992 = vadd.f32 0.0, %v1991
        %v1993 = vpop.f32.mrb[0].mxu0
        %1994 = vmatprep.mubr.f32.mxu0 0.0
        %1995 = vmatmul.mubr.f32.gmra.mrb[0].mxu0 %v1057
        %v1996 = vpop.f32.mrb[0].mxu0
        %v1997 = vadd.f32 0.0, %v1996
        %v1998 = vpop.f32.mrb[0].mxu0
        %1999 = vmatprep.mubr.f32.mxu0 0.0
        %2000 = vmatmul.mubr.f32.gmra.mrb[0].mxu0 %v1060
        %v2001 = vpop.f32.mrb[0].mxu0
        %v2002 = vadd.f32 0.0, %v2001
        %v2003 = vpop.f32.mrb[0].mxu0
        %2004 = vmatprep.mubr.f32.mxu0 0.0
        %2005 = vmatmul.mubr.f32.gmra.mrb[0].mxu0 %v1063
        %v2006 = vpop.f32.mrb[0].mxu0
        %v2007 = vadd.f32 0.0, %v2006
        %v2008 = vpop.f32.mrb[0].mxu0
        %2009 = vmatprep.mubr.f32.mxu0 0.0
        %2010 = vmatmul.mubr.f32.gmra.mrb[0].mxu0 %v1066
        %v2011 = vpop.f32.mrb[0].mxu0
        %v2012 = vadd.f32 0.0, %v2011
        %v2013 = vpop.f32.mrb[0].mxu0
        %2014 = vmatprep.mubr.f32.mxu0 0.0
        %2015 = vmatmul.mubr.f32.gmra.mrb[0].mxu0 %v1069
        %v2016 = vpop.f32.mrb[0].mxu0
        %v2017 = vadd.f32 0.0, %v2016
        %v2018 = vpop.f32.mrb[0].mxu0
        %2019 = vdwg.mxu0
        %2020 = vmatprep.subr.mxu0 0.0
        %2021 = vmatpush1.msra.mxu0 %v1859
        %2022 = vmatprep.subr.mxu0 0.0
        %2023 = vmatpush1.msra.mxu0 %v1860
        %2024 = vmatprep.subr.mxu0 0.0
        %2025 = vmatpush1.msra.mxu0 %v1861
        %2026 = vmatprep.subr.mxu0 0.0
        %2027 = vmatpush1.msra.mxu0 %v1862
        %2028 = vmatprep.subr.mxu0 0.0
        %2029 = vmatpush1.msra.mxu0 %v1863
        %2030 = vmatprep.subr.mxu0 0.0
        %2031 = vmatpush1.msra.mxu0 %v1864
        %2032 = vmatprep.subr.mxu0 0.0
        %2033 = vmatpush1.msra.mxu0 %v1865
        %2034 = vmatprep.subr.mxu0 0.0
        %2035 = vmatpush1.msra.mxu0 %v1866
        %2036 = vmatprep.subr.mxu0 0.0
        %2037 = vmatpush1.msra.mxu0 0.0
        %2038 = vmatprep.subr.mxu0 0.0
        %2039 = vmatpush1.msra.mxu0 0.0
        %2040 = vmatprep.subr.mxu0 0.0
        %2041 = vmatpush1.msra.mxu0 0.0
        %2042 = vmatprep.subr.mxu0 0.0
        %2043 = vmatpush1.msra.mxu0 0.0
        %2044 = vmatprep.subr.mxu0 0.0
        %2045 = vmatpush1.msra.mxu0 0.0
        %2046 = vmatprep.subr.mxu0 0.0
        %2047 = vmatpush1.msra.mxu0 0.0
        %2048 = vmatprep.subr.mxu0 0.0
        %2049 = vmatpush1.msra.mxu0 0.0
        %2050 = vmatprep.subr.mxu0 0.0
        %2051 = vmatpush1.msra.mxu0 0.0
        %2052 = vmatprep.subr.mxu0 0.0
        %2053 = vmatpush1.msra.mxu0 0.0
        %2054 = vmatprep.subr.mxu0 0.0
        %2055 = vmatpush1.msra.mxu0 0.0
        %2056 = vmatprep.subr.mxu0 0.0
        %2057 = vmatpush1.msra.mxu0 0.0
        %2058 = vmatprep.subr.mxu0 0.0
        %2059 = vmatpush1.msra.mxu0 0.0
        %2060 = vmatprep.subr.mxu0 0.0
        %2061 = vmatpush1.msra.mxu0 0.0
        %2062 = vmatprep.subr.mxu0 0.0
        %2063 = vmatpush1.msra.mxu0 0.0
        %2064 = vmatprep.subr.mxu0 0.0
        %2065 = vmatpush1.msra.mxu0 0.0
        %2066 = vmatprep.subr.mxu0 0.0
        %2067 = vmatpush1.msra.mxu0 0.0
        %2068 = vmatprep.subr.mxu0 0.0
        %2069 = vmatpush1.msra.mxu0 0.0
        %2070 = vmatprep.subr.mxu0 0.0
        %2071 = vmatpush1.msra.mxu0 0.0
        %2072 = vmatprep.subr.mxu0 0.0
        %2073 = vmatpush1.msra.mxu0 0.0
        %2074 = vmatprep.subr.mxu0 0.0
        %2075 = vmatpush1.msra.mxu0 0.0
        %2076 = vmatprep.subr.mxu0 0.0
        %2077 = vmatpush1.msra.mxu0 0.0
        %2078 = vmatprep.subr.mxu0 0.0
        %2079 = vmatpush1.msra.mxu0 0.0
        %2080 = vmatprep.subr.mxu0 0.0
        %2081 = vmatpush1.msra.mxu0 0.0
        %2082 = vmatprep.subr.mxu0 0.0
        %2083 = vmatpush1.msra.mxu0 0.0
        %2084 = vmatprep.mubr.f32.mxu0 0.0
        %2085 = vmatmul.mubr.f32.gmra.mrb[0].mxu0 %v823
        %v2086 = vpop.f32.mrb[0].mxu0
        %v2087 = vadd.f32 %v1942, %v2086
        %v2088 = vpop.f32.mrb[0].mxu0
        %2089 = vmatprep.mubr.f32.mxu0 0.0
        %2090 = vmatmul.mubr.f32.gmra.mrb[0].mxu0 %v826
        %v2091 = vpop.f32.mrb[0].mxu0
        %v2092 = vadd.f32 %v1947, %v2091
        %v2093 = vpop.f32.mrb[0].mxu0
        %2094 = vmatprep.mubr.f32.mxu0 0.0
        %2095 = vmatmul.mubr.f32.gmra.mrb[0].mxu0 %v829
        %v2096 = vpop.f32.mrb[0].mxu0
        %v2097 = vadd.f32 %v1952, %v2096
        %v2098 = vpop.f32.mrb[0].mxu0
        %2099 = vmatprep.mubr.f32.mxu0 0.0
        %2100 = vmatmul.mubr.f32.gmra.mrb[0].mxu0 %v832
        %v2101 = vpop.f32.mrb[0].mxu0
        %v2102 = vadd.f32 %v1957, %v2101
        %v2103 = vpop.f32.mrb[0].mxu0
        %2104 = vmatprep.mubr.f32.mxu0 0.0
        %2105 = vmatmul.mubr.f32.gmra.mrb[0].mxu0 %v835
        %v2106 = vpop.f32.mrb[0].mxu0
        %v2107 = vadd.f32 %v1962, %v2106
        %v2108 = vpop.f32.mrb[0].mxu0
        %2109 = vmatprep.mubr.f32.mxu0 0.0
        %2110 = vmatmul.mubr.f32.gmra.mrb[0].mxu0 %v838
        %v2111 = vpop.f32.mrb[0].mxu0
        %v2112 = vadd.f32 %v1967, %v2111
        %v2113 = vpop.f32.mrb[0].mxu0
        %2114 = vmatprep.mubr.f32.mxu0 0.0
        %2115 = vmatmul.mubr.f32.gmra.mrb[0].mxu0 %v841
        %v2116 = vpop.f32.mrb[0].mxu0
        %v2117 = vadd.f32 %v1972, %v2116
        %v2118 = vpop.f32.mrb[0].mxu0
        %2119 = vmatprep.mubr.f32.mxu0 0.0
        %2120 = vmatmul.mubr.f32.gmra.mrb[0].mxu0 %v844
        %v2121 = vpop.f32.mrb[0].mxu0
        %v2122 = vadd.f32 %v1977, %v2121
        %v2123 = vpop.f32.mrb[0].mxu0
        %2124 = vmatprep.mubr.f32.mxu0 0.0
        %2125 = vmatmul.mubr.f32.gmra.mrb[0].mxu0 %v847
        %v2126 = vpop.f32.mrb[0].mxu0
        %v2127 = vadd.f32 %v1982, %v2126
        %v2128 = vpop.f32.mrb[0].mxu0
        %2129 = vmatprep.mubr.f32.mxu0 0.0
        %2130 = vmatmul.mubr.f32.gmra.mrb[0].mxu0 %v850
        %v2131 = vpop.f32.mrb[0].mxu0
        %v2132 = vadd.f32 %v1987, %v2131
        %v2133 = vpop.f32.mrb[0].mxu0
        %2134 = vmatprep.mubr.f32.mxu0 0.0
        %2135 = vmatmul.mubr.f32.gmra.mrb[0].mxu0 %v853
        %v2136 = vpop.f32.mrb[0].mxu0
        %v2137 = vadd.f32 %v1992, %v2136
        %v2138 = vpop.f32.mrb[0].mxu0
        %2139 = vmatprep.mubr.f32.mxu0 0.0
        %2140 = vmatmul.mubr.f32.gmra.mrb[0].mxu0 %v856
        %v2141 = vpop.f32.mrb[0].mxu0
        %v2142 = vadd.f32 %v1997, %v2141
        %v2143 = vpop.f32.mrb[0].mxu0
        %2144 = vmatprep.mubr.f32.mxu0 0.0
        %2145 = vmatmul.mubr.f32.gmra.mrb[0].mxu0 %v859
        %v2146 = vpop.f32.mrb[0].mxu0
        %v2147 = vadd.f32 %v2002, %v2146
        %v2148 = vpop.f32.mrb[0].mxu0
        %2149 = vmatprep.mubr.f32.mxu0 0.0
        %2150 = vmatmul.mubr.f32.gmra.mrb[0].mxu0 %v862
        %v2151 = vpop.f32.mrb[0].mxu0
        %v2152 = vadd.f32 %v2007, %v2151
        %v2153 = vpop.f32.mrb[0].mxu0
        %2154 = vmatprep.mubr.f32.mxu0 0.0
        %2155 = vmatmul.mubr.f32.gmra.mrb[0].mxu0 %v865
        %v2156 = vpop.f32.mrb[0].mxu0
        %v2157 = vadd.f32 %v2012, %v2156
        %v2158 = vpop.f32.mrb[0].mxu0
        %2159 = vmatprep.mubr.f32.mxu0 0.0
        %2160 = vmatmul.mubr.f32.gmra.mrb[0].mxu0 %v868
        %v2161 = vpop.f32.mrb[0].mxu0
        %v2162 = vadd.f32 %v2017, %v2161
        %v2163 = vpop.f32.mrb[0].mxu0
        %2164 = vdwg.mxu0
        %v2165 = vld [vmem:[%s7] sm:$0x1]
        %v2167 = vlaneseq
        %v2168 = vshrl.u32 %v2167, 7
        %v2169 = vsub.s32 0, %v2168
        %v2170 = vrot.slane %v2165, %v2169
        %v2172 = vadd.f32 %v2087, %v2170
        %v2173 = vadd.f32 %v2092, %v2170
        %v2174 = vadd.f32 %v2097, %v2170
        %v2175 = vadd.f32 %v2102, %v2170
        %v2176 = vadd.f32 %v2107, %v2170
        %v2177 = vadd.f32 %v2112, %v2170
        %v2178 = vadd.f32 %v2117, %v2170
        %v2179 = vadd.f32 %v2122, %v2170
        %v2180 = vadd.f32 %v2127, %v2170
        %v2181 = vadd.f32 %v2132, %v2170
        %v2182 = vadd.f32 %v2137, %v2170
        %v2183 = vadd.f32 %v2142, %v2170
        %v2184 = vadd.f32 %v2147, %v2170
        %v2185 = vadd.f32 %v2152, %v2170
        %v2186 = vadd.f32 %v2157, %v2170
        %v2187 = vadd.f32 %v2162, %v2170
        %v2188 = vmax.f32 %v2172, 0.0
        %v2189 = vmax.f32 %v2173, 0.0
        %v2190 = vmax.f32 %v2174, 0.0
        %v2191 = vmax.f32 %v2175, 0.0
        %v2192 = vmax.f32 %v2176, 0.0
        %v2193 = vmax.f32 %v2177, 0.0
        %v2194 = vmax.f32 %v2178, 0.0
        %v2195 = vmax.f32 %v2179, 0.0
        %v2196 = vmax.f32 %v2180, 0.0
        %v2197 = vmax.f32 %v2181, 0.0
        %v2198 = vmax.f32 %v2182, 0.0
        %v2199 = vmax.f32 %v2183, 0.0
        %v2200 = vmax.f32 %v2184, 0.0
        %v2201 = vmax.f32 %v2185, 0.0
        %v2202 = vmax.f32 %v2186, 0.0
        %v2203 = vmax.f32 %v2187, 0.0
        %v2204 = vld [vmem:[%s8] sm:$0xff]
        %v2205 = vld [vmem:[%s8 + $0x8] sm:$0xff]
        %v2206 = vld [vmem:[%s8 + $0x10] sm:$0xf]
        %v2207 = vld [vmem:[%s9] sm:$0x1]
        %v2209 = vlaneseq
        %v2210 = vshrl.u32 %v2209, 7
        %v2211 = vsub.s32 0, %v2210
        %v2212 = vrot.slane %v2207, %v2211
        %vm2214 = vcmask 162816
        %v2216 = vsel %vm2214, %v2188, 0
        %v2219 = vsel %vm2214, %v2189, 0
        %v2222 = vsel %vm2214, %v2190, 0
        %v2225 = vsel %vm2214, %v2191, 0
        %v2228 = vsel %vm2214, %v2192, 0
        %v2231 = vsel %vm2214, %v2193, 0
        %v2234 = vsel %vm2214, %v2194, 0
        %v2237 = vsel %vm2214, %v2195, 0
        %v2240 = vsel %vm2214, %v2196, 0
        %v2243 = vsel %vm2214, %v2197, 0
        %v2246 = vsel %vm2214, %v2198, 0
        %v2249 = vsel %vm2214, %v2199, 0
        %v2252 = vsel %vm2214, %v2200, 0
        %v2255 = vsel %vm2214, %v2201, 0
        %v2258 = vsel %vm2214, %v2202, 0
        %v2261 = vsel %vm2214, %v2203, 0
        %vm2263 = vcmask 1043456
        %v2265 = vsel %vm2263, %v2206, 0
        %2267 = vmatprep.subr.mxu0 0.0
        %2268 = vmatpush1.msra.mxu0 %v2204
        %2269 = vmatprep.subr.mxu0 0.0
        %2270 = vmatpush1.msra.mxu0 %v2205
        %2271 = vmatprep.subr.mxu0 0.0
        %2272 = vmatpush1.msra.mxu0 %v2265
        %2273 = vmatprep.subr.mxu0 0.0
        %2274 = vmatpush1.msra.mxu0 0.0
        %2275 = vmatprep.subr.mxu0 0.0
        %2276 = vmatpush1.msra.mxu0 0.0
        %2277 = vmatprep.subr.mxu0 0.0
        %2278 = vmatpush1.msra.mxu0 0.0
        %2279 = vmatprep.subr.mxu0 0.0
        %2280 = vmatpush1.msra.mxu0 0.0
        %2281 = vmatprep.subr.mxu0 0.0
        %2282 = vmatpush1.msra.mxu0 0.0
        %2283 = vmatprep.subr.mxu0 0.0
        %2284 = vmatpush1.msra.mxu0 0.0
        %2285 = vmatprep.subr.mxu0 0.0
        %2286 = vmatpush1.msra.mxu0 0.0
        %2287 = vmatprep.subr.mxu0 0.0
        %2288 = vmatpush1.msra.mxu0 0.0
        %2289 = vmatprep.subr.mxu0 0.0
        %2290 = vmatpush1.msra.mxu0 0.0
        %2291 = vmatprep.subr.mxu0 0.0
        %2292 = vmatpush1.msra.mxu0 0.0
        %2293 = vmatprep.subr.mxu0 0.0
        %2294 = vmatpush1.msra.mxu0 0.0
        %2295 = vmatprep.subr.mxu0 0.0
        %2296 = vmatpush1.msra.mxu0 0.0
        %2297 = vmatprep.subr.mxu0 0.0
        %2298 = vmatpush1.msra.mxu0 0.0
        %2299 = vmatprep.subr.mxu0 0.0
        %2300 = vmatpush1.msra.mxu0 0.0
        %2301 = vmatprep.subr.mxu0 0.0
        %2302 = vmatpush1.msra.mxu0 0.0
        %2303 = vmatprep.subr.mxu0 0.0
        %2304 = vmatpush1.msra.mxu0 0.0
        %2305 = vmatprep.subr.mxu0 0.0
        %2306 = vmatpush1.msra.mxu0 0.0
        %2307 = vmatprep.subr.mxu0 0.0
        %2308 = vmatpush1.msra.mxu0 0.0
        %2309 = vmatprep.subr.mxu0 0.0
        %2310 = vmatpush1.msra.mxu0 0.0
        %2311 = vmatprep.subr.mxu0 0.0
        %2312 = vmatpush1.msra.mxu0 0.0
        %2313 = vmatprep.subr.mxu0 0.0
        %2314 = vmatpush1.msra.mxu0 0.0
        %2315 = vmatprep.subr.mxu0 0.0
        %2316 = vmatpush1.msra.mxu0 0.0
        %2317 = vmatprep.subr.mxu0 0.0
        %2318 = vmatpush1.msra.mxu0 0.0
        %2319 = vmatprep.subr.mxu0 0.0
        %2320 = vmatpush1.msra.mxu0 0.0
        %2321 = vmatprep.subr.mxu0 0.0
        %2322 = vmatpush1.msra.mxu0 0.0
        %2323 = vmatprep.subr.mxu0 0.0
        %2324 = vmatpush1.msra.mxu0 0.0
        %2325 = vmatprep.subr.mxu0 0.0
        %2326 = vmatpush1.msra.mxu0 0.0
        %2327 = vmatprep.subr.mxu0 0.0
        %2328 = vmatpush1.msra.mxu0 0.0
        %2329 = vmatprep.subr.mxu0 0.0
        %2330 = vmatpush1.msra.mxu0 0.0
        %2331 = vmatprep.mubr.f32.mxu0 0.0
        %2332 = vmatmul.mubr.f32.gmra.mrb[0].mxu0 %v2216
        %v2333 = vpop.f32.mrb[0].mxu0
        %v2334 = vadd.f32 %v2212, %v2333
        %v2335 = vpop.f32.mrb[0].mxu0
        %2336 = vmatprep.mubr.f32.mxu0 0.0
        %2337 = vmatmul.mubr.f32.gmra.mrb[0].mxu0 %v2219
        %v2338 = vpop.f32.mrb[0].mxu0
        %v2339 = vadd.f32 %v2212, %v2338
        %v2340 = vpop.f32.mrb[0].mxu0
        %2341 = vmatprep.mubr.f32.mxu0 0.0
        %2342 = vmatmul.mubr.f32.gmra.mrb[0].mxu0 %v2222
        %v2343 = vpop.f32.mrb[0].mxu0
        %v2344 = vadd.f32 %v2212, %v2343
        %v2345 = vpop.f32.mrb[0].mxu0
        %2346 = vmatprep.mubr.f32.mxu0 0.0
        %2347 = vmatmul.mubr.f32.gmra.mrb[0].mxu0 %v2225
        %v2348 = vpop.f32.mrb[0].mxu0
        %v2349 = vadd.f32 %v2212, %v2348
        %v2350 = vpop.f32.mrb[0].mxu0
        %2351 = vmatprep.mubr.f32.mxu0 0.0
        %2352 = vmatmul.mubr.f32.gmra.mrb[0].mxu0 %v2228
        %v2353 = vpop.f32.mrb[0].mxu0
        %v2354 = vadd.f32 %v2212, %v2353
        %v2355 = vpop.f32.mrb[0].mxu0
        %2356 = vmatprep.mubr.f32.mxu0 0.0
        %2357 = vmatmul.mubr.f32.gmra.mrb[0].mxu0 %v2231
        %v2358 = vpop.f32.mrb[0].mxu0
        %v2359 = vadd.f32 %v2212, %v2358
        %v2360 = vpop.f32.mrb[0].mxu0
        %2361 = vmatprep.mubr.f32.mxu0 0.0
        %2362 = vmatmul.mubr.f32.gmra.mrb[0].mxu0 %v2234
        %v2363 = vpop.f32.mrb[0].mxu0
        %v2364 = vadd.f32 %v2212, %v2363
        %v2365 = vpop.f32.mrb[0].mxu0
        %2366 = vmatprep.mubr.f32.mxu0 0.0
        %2367 = vmatmul.mubr.f32.gmra.mrb[0].mxu0 %v2237
        %v2368 = vpop.f32.mrb[0].mxu0
        %v2369 = vadd.f32 %v2212, %v2368
        %v2370 = vpop.f32.mrb[0].mxu0
        %2371 = vmatprep.mubr.f32.mxu0 0.0
        %2372 = vmatmul.mubr.f32.gmra.mrb[0].mxu0 %v2240
        %v2373 = vpop.f32.mrb[0].mxu0
        %v2374 = vadd.f32 %v2212, %v2373
        %v2375 = vpop.f32.mrb[0].mxu0
        %2376 = vmatprep.mubr.f32.mxu0 0.0
        %2377 = vmatmul.mubr.f32.gmra.mrb[0].mxu0 %v2243
        %v2378 = vpop.f32.mrb[0].mxu0
        %v2379 = vadd.f32 %v2212, %v2378
        %v2380 = vpop.f32.mrb[0].mxu0
        %2381 = vmatprep.mubr.f32.mxu0 0.0
        %2382 = vmatmul.mubr.f32.gmra.mrb[0].mxu0 %v2246
        %v2383 = vpop.f32.mrb[0].mxu0
        %v2384 = vadd.f32 %v2212, %v2383
        %v2385 = vpop.f32.mrb[0].mxu0
        %2386 = vmatprep.mubr.f32.mxu0 0.0
        %2387 = vmatmul.mubr.f32.gmra.mrb[0].mxu0 %v2249
        %v2388 = vpop.f32.mrb[0].mxu0
        %v2389 = vadd.f32 %v2212, %v2388
        %v2390 = vpop.f32.mrb[0].mxu0
        %2391 = vmatprep.mubr.f32.mxu0 0.0
        %2392 = vmatmul.mubr.f32.gmra.mrb[0].mxu0 %v2252
        %v2393 = vpop.f32.mrb[0].mxu0
        %v2394 = vadd.f32 %v2212, %v2393
        %v2395 = vpop.f32.mrb[0].mxu0
        %2396 = vmatprep.mubr.f32.mxu0 0.0
        %2397 = vmatmul.mubr.f32.gmra.mrb[0].mxu0 %v2255
        %v2398 = vpop.f32.mrb[0].mxu0
        %v2399 = vadd.f32 %v2212, %v2398
        %v2400 = vpop.f32.mrb[0].mxu0
        %2401 = vmatprep.mubr.f32.mxu0 0.0
        %2402 = vmatmul.mubr.f32.gmra.mrb[0].mxu0 %v2258
        %v2403 = vpop.f32.mrb[0].mxu0
        %v2404 = vadd.f32 %v2212, %v2403
        %v2405 = vpop.f32.mrb[0].mxu0
        %2406 = vmatprep.mubr.f32.mxu0 0.0
        %2407 = vmatmul.mubr.f32.gmra.mrb[0].mxu0 %v2261
        %v2408 = vpop.f32.mrb[0].mxu0
        %v2409 = vadd.f32 %v2212, %v2408
        %v2410 = vpop.f32.mrb[0].mxu0
        %2411 = vdwg.mxu0
        %v2412 = vmax.f32 %v2334, 0.0
        %v2413 = vmax.f32 %v2339, 0.0
        %v2414 = vmax.f32 %v2344, 0.0
        %v2415 = vmax.f32 %v2349, 0.0
        %v2416 = vmax.f32 %v2354, 0.0
        %v2417 = vmax.f32 %v2359, 0.0
        %v2418 = vmax.f32 %v2364, 0.0
        %v2419 = vmax.f32 %v2369, 0.0
        %v2420 = vmax.f32 %v2374, 0.0
        %v2421 = vmax.f32 %v2379, 0.0
        %v2422 = vmax.f32 %v2384, 0.0
        %v2423 = vmax.f32 %v2389, 0.0
        %v2424 = vmax.f32 %v2394, 0.0
        %v2425 = vmax.f32 %v2399, 0.0
        %v2426 = vmax.f32 %v2404, 0.0
        %v2427 = vmax.f32 %v2409, 0.0
        %v2428 = vld [vmem:[%s10] sm:$0xff]
        %v2429 = vld [vmem:[%s10 + $0x8] sm:$0x3]
        %v2430 = vld [vmem:[%s11] sm:$0x1]
        %v2432 = vlaneseq
        %v2433 = vshrl.u32 %v2432, 7
        %v2434 = vsub.s32 0, %v2433
        %v2435 = vrot.slane %v2430, %v2434
        %vm2437 = vcmask 80896
        %v2439 = vsel %vm2437, %v2412, 0
        %v2442 = vsel %vm2437, %v2413, 0
        %v2445 = vsel %vm2437, %v2414, 0
        %v2448 = vsel %vm2437, %v2415, 0
        %v2451 = vsel %vm2437, %v2416, 0
        %v2454 = vsel %vm2437, %v2417, 0
        %v2457 = vsel %vm2437, %v2418, 0
        %v2460 = vsel %vm2437, %v2419, 0
        %v2463 = vsel %vm2437, %v2420, 0
        %v2466 = vsel %vm2437, %v2421, 0
        %v2469 = vsel %vm2437, %v2422, 0
        %v2472 = vsel %vm2437, %v2423, 0
        %v2475 = vsel %vm2437, %v2424, 0
        %v2478 = vsel %vm2437, %v2425, 0
        %v2481 = vsel %vm2437, %v2426, 0
        %v2484 = vsel %vm2437, %v2427, 0
        %vm2486 = vcmask 1041408
        %v2488 = vsel %vm2486, %v2429, 0
        %2490 = vmatprep.subr.mxu0 0.0
        %2491 = vmatpush1.msra.mxu0 %v2428
        %2492 = vmatprep.subr.mxu0 0.0
        %2493 = vmatpush1.msra.mxu0 %v2488
        %2494 = vmatprep.subr.mxu0 0.0
        %2495 = vmatpush1.msra.mxu0 0.0
        %2496 = vmatprep.subr.mxu0 0.0
        %2497 = vmatpush1.msra.mxu0 0.0
        %2498 = vmatprep.subr.mxu0 0.0
        %2499 = vmatpush1.msra.mxu0 0.0
        %2500 = vmatprep.subr.mxu0 0.0
        %2501 = vmatpush1.msra.mxu0 0.0
        %2502 = vmatprep.subr.mxu0 0.0
        %2503 = vmatpush1.msra.mxu0 0.0
        %2504 = vmatprep.subr.mxu0 0.0
        %2505 = vmatpush1.msra.mxu0 0.0
        %2506 = vmatprep.subr.mxu0 0.0
        %2507 = vmatpush1.msra.mxu0 0.0
        %2508 = vmatprep.subr.mxu0 0.0
        %2509 = vmatpush1.msra.mxu0 0.0
        %2510 = vmatprep.subr.mxu0 0.0
        %2511 = vmatpush1.msra.mxu0 0.0
        %2512 = vmatprep.subr.mxu0 0.0
        %2513 = vmatpush1.msra.mxu0 0.0
        %2514 = vmatprep.subr.mxu0 0.0
        %2515 = vmatpush1.msra.mxu0 0.0
        %2516 = vmatprep.subr.mxu0 0.0
        %2517 = vmatpush1.msra.mxu0 0.0
        %2518 = vmatprep.subr.mxu0 0.0
        %2519 = vmatpush1.msra.mxu0 0.0
        %2520 = vmatprep.subr.mxu0 0.0
        %2521 = vmatpush1.msra.mxu0 0.0
        %2522 = vmatprep.subr.mxu0 0.0
        %2523 = vmatpush1.msra.mxu0 0.0
        %2524 = vmatprep.subr.mxu0 0.0
        %2525 = vmatpush1.msra.mxu0 0.0
        %2526 = vmatprep.subr.mxu0 0.0
        %2527 = vmatpush1.msra.mxu0 0.0
        %2528 = vmatprep.subr.mxu0 0.0
        %2529 = vmatpush1.msra.mxu0 0.0
        %2530 = vmatprep.subr.mxu0 0.0
        %2531 = vmatpush1.msra.mxu0 0.0
        %2532 = vmatprep.subr.mxu0 0.0
        %2533 = vmatpush1.msra.mxu0 0.0
        %2534 = vmatprep.subr.mxu0 0.0
        %2535 = vmatpush1.msra.mxu0 0.0
        %2536 = vmatprep.subr.mxu0 0.0
        %2537 = vmatpush1.msra.mxu0 0.0
        %2538 = vmatprep.subr.mxu0 0.0
        %2539 = vmatpush1.msra.mxu0 0.0
        %2540 = vmatprep.subr.mxu0 0.0
        %2541 = vmatpush1.msra.mxu0 0.0
        %2542 = vmatprep.subr.mxu0 0.0
        %2543 = vmatpush1.msra.mxu0 0.0
        %2544 = vmatprep.subr.mxu0 0.0
        %2545 = vmatpush1.msra.mxu0 0.0
        %2546 = vmatprep.subr.mxu0 0.0
        %2547 = vmatpush1.msra.mxu0 0.0
        %2548 = vmatprep.subr.mxu0 0.0
        %2549 = vmatpush1.msra.mxu0 0.0
        %2550 = vmatprep.subr.mxu0 0.0
        %2551 = vmatpush1.msra.mxu0 0.0
        %2552 = vmatprep.subr.mxu0 0.0
        %2553 = vmatpush1.msra.mxu0 0.0
        %2554 = vmatprep.mubr.f32.mxu0 0.0
        %2555 = vmatmul.mubr.f32.gmra.mrb[0].mxu0 %v2439
        %v2556 = vpop.f32.mrb[0].mxu0
        %v2557 = vadd.f32 %v2435, %v2556
        %v2558 = vpop.f32.mrb[0].mxu0
        %2559 = vmatprep.mubr.f32.mxu0 0.0
        %2560 = vmatmul.mubr.f32.gmra.mrb[0].mxu0 %v2442
        %v2561 = vpop.f32.mrb[0].mxu0
        %v2562 = vadd.f32 %v2435, %v2561
        %v2563 = vpop.f32.mrb[0].mxu0
        %2564 = vmatprep.mubr.f32.mxu0 0.0
        %2565 = vmatmul.mubr.f32.gmra.mrb[0].mxu0 %v2445
        %v2566 = vpop.f32.mrb[0].mxu0
        %v2567 = vadd.f32 %v2435, %v2566
        %v2568 = vpop.f32.mrb[0].mxu0
        %2569 = vmatprep.mubr.f32.mxu0 0.0
        %2570 = vmatmul.mubr.f32.gmra.mrb[0].mxu0 %v2448
        %v2571 = vpop.f32.mrb[0].mxu0
        %v2572 = vadd.f32 %v2435, %v2571
        %v2573 = vpop.f32.mrb[0].mxu0
        %2574 = vmatprep.mubr.f32.mxu0 0.0
        %2575 = vmatmul.mubr.f32.gmra.mrb[0].mxu0 %v2451
        %v2576 = vpop.f32.mrb[0].mxu0
        %v2577 = vadd.f32 %v2435, %v2576
        %v2578 = vpop.f32.mrb[0].mxu0
        %2579 = vmatprep.mubr.f32.mxu0 0.0
        %2580 = vmatmul.mubr.f32.gmra.mrb[0].mxu0 %v2454
        %v2581 = vpop.f32.mrb[0].mxu0
        %v2582 = vadd.f32 %v2435, %v2581
        %v2583 = vpop.f32.mrb[0].mxu0
        %2584 = vmatprep.mubr.f32.mxu0 0.0
        %2585 = vmatmul.mubr.f32.gmra.mrb[0].mxu0 %v2457
        %v2586 = vpop.f32.mrb[0].mxu0
        %v2587 = vadd.f32 %v2435, %v2586
        %v2588 = vpop.f32.mrb[0].mxu0
        %2589 = vmatprep.mubr.f32.mxu0 0.0
        %2590 = vmatmul.mubr.f32.gmra.mrb[0].mxu0 %v2460
        %v2591 = vpop.f32.mrb[0].mxu0
        %v2592 = vadd.f32 %v2435, %v2591
        %v2593 = vpop.f32.mrb[0].mxu0
        %2594 = vmatprep.mubr.f32.mxu0 0.0
        %2595 = vmatmul.mubr.f32.gmra.mrb[0].mxu0 %v2463
        %v2596 = vpop.f32.mrb[0].mxu0
        %v2597 = vadd.f32 %v2435, %v2596
        %v2598 = vpop.f32.mrb[0].mxu0
        %2599 = vmatprep.mubr.f32.mxu0 0.0
        %2600 = vmatmul.mubr.f32.gmra.mrb[0].mxu0 %v2466
        %v2601 = vpop.f32.mrb[0].mxu0
        %v2602 = vadd.f32 %v2435, %v2601
        %v2603 = vpop.f32.mrb[0].mxu0
        %2604 = vmatprep.mubr.f32.mxu0 0.0
        %2605 = vmatmul.mubr.f32.gmra.mrb[0].mxu0 %v2469
        %v2606 = vpop.f32.mrb[0].mxu0
        %v2607 = vadd.f32 %v2435, %v2606
        %v2608 = vpop.f32.mrb[0].mxu0
        %2609 = vmatprep.mubr.f32.mxu0 0.0
        %2610 = vmatmul.mubr.f32.gmra.mrb[0].mxu0 %v2472
        %v2611 = vpop.f32.mrb[0].mxu0
        %v2612 = vadd.f32 %v2435, %v2611
        %v2613 = vpop.f32.mrb[0].mxu0
        %2614 = vmatprep.mubr.f32.mxu0 0.0
        %2615 = vmatmul.mubr.f32.gmra.mrb[0].mxu0 %v2475
        %v2616 = vpop.f32.mrb[0].mxu0
        %v2617 = vadd.f32 %v2435, %v2616
        %v2618 = vpop.f32.mrb[0].mxu0
        %2619 = vmatprep.mubr.f32.mxu0 0.0
        %2620 = vmatmul.mubr.f32.gmra.mrb[0].mxu0 %v2478
        %v2621 = vpop.f32.mrb[0].mxu0
        %v2622 = vadd.f32 %v2435, %v2621
        %v2623 = vpop.f32.mrb[0].mxu0
        %2624 = vmatprep.mubr.f32.mxu0 0.0
        %2625 = vmatmul.mubr.f32.gmra.mrb[0].mxu0 %v2481
        %v2626 = vpop.f32.mrb[0].mxu0
        %v2627 = vadd.f32 %v2435, %v2626
        %v2628 = vpop.f32.mrb[0].mxu0
        %2629 = vmatprep.mubr.f32.mxu0 0.0
        %2630 = vmatmul.mubr.f32.gmra.mrb[0].mxu0 %v2484
        %v2631 = vpop.f32.mrb[0].mxu0
        %v2632 = vadd.f32 %v2435, %v2631
        %v2633 = vpop.f32.mrb[0].mxu0
        %2634 = vdwg.mxu0
        %v2635 = vadd.f32 %v1216, %v2557
        %v2636 = vadd.f32 %v1217, %v2562
        %v2637 = vadd.f32 %v1218, %v2567
        %v2638 = vadd.f32 %v1219, %v2572
        %v2639 = vadd.f32 %v1220, %v2577
        %v2640 = vadd.f32 %v1221, %v2582
        %v2641 = vadd.f32 %v1222, %v2587
        %v2642 = vadd.f32 %v1223, %v2592
        %v2643 = vadd.f32 %v1224, %v2597
        %v2644 = vadd.f32 %v1225, %v2602
        %v2645 = vadd.f32 %v1226, %v2607
        %v2646 = vadd.f32 %v1227, %v2612
        %v2647 = vadd.f32 %v1228, %v2617
        %v2648 = vadd.f32 %v1229, %v2622
        %v2649 = vadd.f32 %v1230, %v2627
        %v2650 = vadd.f32 %v1231, %v2632
        %2667 = vrot.lane.b32.xlu0 %v1425, 32
        %v2668 = vpop.permute.xlu0 %2667
        %2669 = vrot.lane.b32.xlu0 %v1426, 32
        %v2670 = vpop.permute.xlu0 %2669
        %2671 = vrot.lane.b32.xlu0 %v1427, 32
        %v2672 = vpop.permute.xlu0 %2671
        %2673 = vrot.lane.b32.xlu0 %v1428, 32
        %v2674 = vpop.permute.xlu0 %2673
        %2675 = vrot.lane.b32.xlu0 %v1429, 32
        %v2676 = vpop.permute.xlu0 %2675
        %2677 = vrot.lane.b32.xlu0 %v1430, 32
        %v2678 = vpop.permute.xlu0 %2677
        %2679 = vrot.lane.b32.xlu0 %v1431, 32
        %v2680 = vpop.permute.xlu0 %2679
        %2681 = vrot.lane.b32.xlu0 %v1432, 32
        %v2682 = vpop.permute.xlu0 %2681
        %2683 = vrot.lane.b32.xlu0 %v1433, 32
        %v2684 = vpop.permute.xlu0 %2683
        %2685 = vrot.lane.b32.xlu0 %v1434, 32
        %v2686 = vpop.permute.xlu0 %2685
        %2687 = vrot.lane.b32.xlu0 %v1435, 32
        %v2688 = vpop.permute.xlu0 %2687
        %2689 = vrot.lane.b32.xlu0 %v1436, 32
        %v2690 = vpop.permute.xlu0 %2689
        %2691 = vrot.lane.b32.xlu0 %v1437, 32
        %v2692 = vpop.permute.xlu0 %2691
        %2693 = vrot.lane.b32.xlu0 %v1438, 32
        %v2694 = vpop.permute.xlu0 %2693
        %2695 = vrot.lane.b32.xlu0 %v1439, 32
        %v2696 = vpop.permute.xlu0 %2695
        %2697 = vrot.lane.b32.xlu0 %v1440, 32
        %v2698 = vpop.permute.xlu0 %2697
        %2731 = vrot.lane.b32.xlu0 %v1634, 64
        %v2732 = vpop.permute.xlu0 %2731
        %2733 = vrot.lane.b32.xlu0 %v1635, 64
        %v2734 = vpop.permute.xlu0 %2733
        %2735 = vrot.lane.b32.xlu0 %v1636, 64
        %v2736 = vpop.permute.xlu0 %2735
        %2737 = vrot.lane.b32.xlu0 %v1637, 64
        %v2738 = vpop.permute.xlu0 %2737
        %2739 = vrot.lane.b32.xlu0 %v1638, 64
        %v2740 = vpop.permute.xlu0 %2739
        %2741 = vrot.lane.b32.xlu0 %v1639, 64
        %v2742 = vpop.permute.xlu0 %2741
        %2743 = vrot.lane.b32.xlu0 %v1640, 64
        %v2744 = vpop.permute.xlu0 %2743
        %2745 = vrot.lane.b32.xlu0 %v1641, 64
        %v2746 = vpop.permute.xlu0 %2745
        %2747 = vrot.lane.b32.xlu0 %v1642, 64
        %v2748 = vpop.permute.xlu0 %2747
        %2749 = vrot.lane.b32.xlu0 %v1643, 64
        %v2750 = vpop.permute.xlu0 %2749
        %2751 = vrot.lane.b32.xlu0 %v1644, 64
        %v2752 = vpop.permute.xlu0 %2751
        %2753 = vrot.lane.b32.xlu0 %v1645, 64
        %v2754 = vpop.permute.xlu0 %2753
        %2755 = vrot.lane.b32.xlu0 %v1646, 64
        %v2756 = vpop.permute.xlu0 %2755
        %2757 = vrot.lane.b32.xlu0 %v1647, 64
        %v2758 = vpop.permute.xlu0 %2757
        %2759 = vrot.lane.b32.xlu0 %v1648, 64
        %v2760 = vpop.permute.xlu0 %2759
        %2761 = vrot.lane.b32.xlu0 %v1649, 64
        %v2762 = vpop.permute.xlu0 %2761
        %2795 = vrot.lane.b32.xlu0 %v1843, 96
        %v2796 = vpop.permute.xlu0 %2795
        %2797 = vrot.lane.b32.xlu0 %v1844, 96
        %v2798 = vpop.permute.xlu0 %2797
        %2799 = vrot.lane.b32.xlu0 %v1845, 96
        %v2800 = vpop.permute.xlu0 %2799
        %2801 = vrot.lane.b32.xlu0 %v1846, 96
        %v2802 = vpop.permute.xlu0 %2801
        %2803 = vrot.lane.b32.xlu0 %v1847, 96
        %v2804 = vpop.permute.xlu0 %2803
        %2805 = vrot.lane.b32.xlu0 %v1848, 96
        %v2806 = vpop.permute.xlu0 %2805
        %2807 = vrot.lane.b32.xlu0 %v1849, 96
        %v2808 = vpop.permute.xlu0 %2807
        %2809 = vrot.lane.b32.xlu0 %v1850, 96
        %v2810 = vpop.permute.xlu0 %2809
        %2811 = vrot.lane.b32.xlu0 %v1851, 96
        %v2812 = vpop.permute.xlu0 %2811
        %2813 = vrot.lane.b32.xlu0 %v1852, 96
        %v2814 = vpop.permute.xlu0 %2813
        %2815 = vrot.lane.b32.xlu0 %v1853, 96
        %v2816 = vpop.permute.xlu0 %2815
        %2817 = vrot.lane.b32.xlu0 %v1854, 96
        %v2818 = vpop.permute.xlu0 %2817
        %2819 = vrot.lane.b32.xlu0 %v1855, 96
        %v2820 = vpop.permute.xlu0 %2819
        %2821 = vrot.lane.b32.xlu0 %v1856, 96
        %v2822 = vpop.permute.xlu0 %2821
        %2823 = vrot.lane.b32.xlu0 %v1857, 96
        %v2824 = vpop.permute.xlu0 %2823
        %2825 = vrot.lane.b32.xlu0 %v1858, 96
        %v2826 = vpop.permute.xlu0 %2825
        %vm2843 = vcmask 261120
        %v2844 = vsel %vm2843, %v2635, %v2668
        %v2845 = vsel %vm2843, %v2636, %v2670
        %v2846 = vsel %vm2843, %v2637, %v2672
        %v2847 = vsel %vm2843, %v2638, %v2674
        %v2848 = vsel %vm2843, %v2639, %v2676
        %v2849 = vsel %vm2843, %v2640, %v2678
        %v2850 = vsel %vm2843, %v2641, %v2680
        %v2851 = vsel %vm2843, %v2642, %v2682
        %v2852 = vsel %vm2843, %v2643, %v2684
        %v2853 = vsel %vm2843, %v2644, %v2686
        %v2854 = vsel %vm2843, %v2645, %v2688
        %v2855 = vsel %vm2843, %v2646, %v2690
        %v2856 = vsel %vm2843, %v2647, %v2692
        %v2857 = vsel %vm2843, %v2648, %v2694
        %v2858 = vsel %vm2843, %v2649, %v2696
        %v2859 = vsel %vm2843, %v2650, %v2698
        %v2860 = vsel %vm821, %v2844, %v2732
        %v2861 = vsel %vm821, %v2845, %v2734
        %v2862 = vsel %vm821, %v2846, %v2736
        %v2863 = vsel %vm821, %v2847, %v2738
        %v2864 = vsel %vm821, %v2848, %v2740
        %v2865 = vsel %vm821, %v2849, %v2742
        %v2866 = vsel %vm821, %v2850, %v2744
        %v2867 = vsel %vm821, %v2851, %v2746
        %v2868 = vsel %vm821, %v2852, %v2748
        %v2869 = vsel %vm821, %v2853, %v2750
        %v2870 = vsel %vm821, %v2854, %v2752
        %v2871 = vsel %vm821, %v2855, %v2754
        %v2872 = vsel %vm821, %v2856, %v2756
        %v2873 = vsel %vm821, %v2857, %v2758
        %v2874 = vsel %vm821, %v2858, %v2760
        %v2875 = vsel %vm821, %v2859, %v2762
        %vm2876 = vcmask 785408
        %v2877 = vsel %vm2876, %v2860, %v2796
        %v2878 = vsel %vm2876, %v2861, %v2798
        %v2879 = vsel %vm2876, %v2862, %v2800
        %v2880 = vsel %vm2876, %v2863, %v2802
        %v2881 = vsel %vm2876, %v2864, %v2804
        %v2882 = vsel %vm2876, %v2865, %v2806
        %v2883 = vsel %vm2876, %v2866, %v2808
        %v2884 = vsel %vm2876, %v2867, %v2810
        %v2885 = vsel %vm2876, %v2868, %v2812
        %v2886 = vsel %vm2876, %v2869, %v2814
        %v2887 = vsel %vm2876, %v2870, %v2816
        %v2888 = vsel %vm2876, %v2871, %v2818
        %v2889 = vsel %vm2876, %v2872, %v2820
        %v2890 = vsel %vm2876, %v2873, %v2822
        %v2891 = vsel %vm2876, %v2874, %v2824
        %v2892 = vsel %vm2876, %v2875, %v2826
        %2893 = vst [vmem:[%s714] sm:$0xff] %v2877
        %2894 = vst [vmem:[%s714 + $0x8] sm:$0xff] %v2878
        %2895 = vst [vmem:[%s714 + $0x10] sm:$0xff] %v2879
        %2896 = vst [vmem:[%s714 + $0x18] sm:$0xff] %v2880
        %2897 = vst [vmem:[%s714 + $0x20] sm:$0xff] %v2881
        %2898 = vst [vmem:[%s714 + $0x28] sm:$0xff] %v2882
        %2899 = vst [vmem:[%s714 + $0x30] sm:$0xff] %v2883
        %2900 = vst [vmem:[%s714 + $0x38] sm:$0xff] %v2884
        %2901 = vst [vmem:[%s714 + $0x40] sm:$0xff] %v2885
        %2902 = vst [vmem:[%s714 + $0x48] sm:$0xff] %v2886
        %2903 = vst [vmem:[%s714 + $0x50] sm:$0xff] %v2887
        %2904 = vst [vmem:[%s714 + $0x58] sm:$0xff] %v2888
        %2905 = vst [vmem:[%s714 + $0x60] sm:$0xff] %v2889
        %2906 = vst [vmem:[%s714 + $0x68] sm:$0xff] %v2890
        %2907 = vst [vmem:[%s714 + $0x70] sm:$0xff] %v2891
        %2908 = vst [vmem:[%s714 + $0x78] sm:$0xff] %v2892
        %s2909 = sand.u32 %s296, 1
        %s2910 = scalar_lea.sflag [#allocation4], %s2909
        %s2911 = sand.u32 %s296, 1
        %s2912 = smul.addr %s2911, 128
        %s2913 = scalar_lea.vmem [#allocation3], %s2912
        // Predicated region
        $region107: #{tpu_custom_call.1} parent=101 // pred_check
          %p2914 = pneg %p306
        $region108: #{tpu_custom_call.1} parent=101 // pred_check_branch
          %2916 = sbr.rel (%p2914) target = $region110
        $region109: #{tpu_custom_call.1} parent=101 // pred_region
          %s2917 = smul.u32 16, %s26
          %s2919 = ssub.s32 2048, 2048
          %2920 = vsyncadd %s2910, %s2919
          %s2921 = smul.addr %s2917, 128
          %s2922 = scalar_lea.hbm %s12, %s2921
          %s2923 = sshll.u32 %s2913, 4
          %s2924 = int_to_ptr.vmem [resolvable:$true] %s2923
          %2929 = dma.vmem_to_hbm [thread:$0]  %s2924, 2048, %s2922, %s2910, 128, 128, 8
        $region110: #{tpu_custom_call.1} parent=101 // pred_fallthru
          _
      $region102: #{tpu_custom_call.1} parent=5 // pred_fallthru
        _
      %p2930 = scmp.le.s32.totalorder 2, %s21
      // Predicated region
      $region111: #{tpu_custom_call.1} parent=5 // pred_check
        %p2931 = pneg %p2930
      $region112: #{tpu_custom_call.1} parent=5 // pred_check_branch
        %2933 = sbr.rel (%p2931) target = $region114
      $region113: #{tpu_custom_call.1} parent=5 // pred_region
        %s2934 = ssub.s32 %s21, 2
        // Predicated region
        $region115: #{tpu_custom_call.1} parent=113 // pred_check
          %p2935 = pneg %p312
        $region116: #{tpu_custom_call.1} parent=113 // pred_check_branch
          %2937 = sbr.rel (%p2935) target = $region118
        $region117: #{tpu_custom_call.1} parent=113 // pred_region
          %s2938 = sand.u32 %s297, 1
          %s2939 = scalar_lea.sflag [#allocation4], %s2938
          %s2940 = sand.u32 %s297, 1
          %s2941 = smul.addr %s2940, 128
          %s2942 = scalar_lea.vmem [#allocation3], %s2941
          %2943 = dma.done %s2939, 2048
        $region118: #{tpu_custom_call.1} parent=113 // pred_fallthru
          _
      $region114: #{tpu_custom_call.1} parent=5 // pred_fallthru
        _
    $region6: #{tpu_custom_call.1} parent=1 // loop_footer
      %s25 = sadd.s32 1, %s21
    $region7: #{tpu_custom_call.1} parent=1 // loop_footer_branch
      %20 = sbr.rel target = $region3
    $region8: #{tpu_custom_call.1} parent=1 // loop_exit
      _
    %2944 = vsyncpa [#allocation4], 1
    %s2945 = scalar_lea.sflag [#allocation4], 1
    %2946 = vsyncpa %s2945, 1

</llo_original>
